<compile_context>
chip_gen: v7x
topology: tpu7x:2x2x1
jax: 0.10.0
libtpu: 0.0.40
codegen_flags: <defaults>
</compile_context>

<pallas_src>
import functools

import jax
import jax.numpy as jnp
from jax.experimental import pallas as pl
from jax.experimental.pallas import tpu as pltpu


def _round_up(n, m):
    return ((n + m - 1) // m) * m


# ----------------------------------------------------------------------------
# Fused Pallas kernel: entire NetworkBack forward pass (one batch tile / step)
# ----------------------------------------------------------------------------
def _fused_kernel(*refs, n_enc_hidden, n_avg, n_res):
    it = iter(refs)
    x_ref = next(it)                 # (TB, state)          f32
    noise_ref = next(it)             # (TB, L)              f32
    pmu_ref = next(it)               # (1, L)               f32
    plog_ref = next(it)              # (1, L)               f32
    enc_hidden = [(next(it), next(it)) for _ in range(n_enc_hidden)]
    w_mu_ref, b_mu_ref = next(it), next(it)
    w_lv_ref, b_lv_ref = next(it), next(it)
    avg_layers = [(next(it), next(it)) for _ in range(n_avg)]
    res_layers = [(next(it), next(it)) for _ in range(n_res)]
    wbig_ref = next(it)              # (C0*H*W, C*H*W)      bf16 (conv as matmul)
    bbig_ref = next(it)              # (1, C*H*W)           f32
    o_bck_ref = next(it)             # (TB, C*H*W)          f32, lane-dense
    o_kld_ref = next(it)             # (TB, L)              f32, per-element KLD

    def mm(v, w_ref, b_ref):
        # bf16 LHS/RHS on the MXU, f32 accumulation, f32 bias add.
        return (jnp.dot(v.astype(jnp.bfloat16), w_ref[...],
                        preferred_element_type=jnp.float32) + b_ref[...])

    def run_mlp(v, layers, relu_last):
        n = len(layers)
        for i, (w, b) in enumerate(layers):
            v = mm(v, w, b)
            if i < n - 1 or relu_last:
                v = jnp.maximum(v, 0.0)
        return v

    # ---- encode: hidden layers, then split mu / logvar heads (lane-0 aligned)
    h = x_ref[...]
    for w, b in enc_hidden:
        h = jnp.maximum(mm(h, w, b), 0.0)
    mu = mm(h, w_mu_ref, b_mu_ref)
    logvar = mm(h, w_lv_ref, b_lv_ref)

    # ---- reparameterize (fp32 elementwise) ----
    std = jnp.exp(0.5 * logvar)
    sample = mu + std * noise_ref[...]

    # ---- KLD vs N(prior_mu, exp(prior_logvar)), per-element (summed outside)
    prior_mu = pmu_ref[...]
    prior_logvar = plog_ref[...]
    prior_invvar = jnp.exp(-prior_logvar)
    kld_el = 0.5 * (prior_logvar - logvar
                    + prior_invvar * ((mu - prior_mu) ** 2 + jnp.exp(logvar))
                    - 1.0)
    o_kld_ref[...] = kld_el

    # ---- decode: average path (spatial broadcast + 0.5 scale folded offline)
    x_avg = run_mlp(sample, avg_layers, relu_last=False)     # (TB, C*H*W)

    # ---- decode: residual path (pre-conv ReLU fused; conv is one dense matmul)
    hres = run_mlp(sample, res_layers, relu_last=True)        # (TB, C0*H*W)
    x_res = (jnp.dot(hres.astype(jnp.bfloat16), wbig_ref[...],
                     preferred_element_type=jnp.float32) + bbig_ref[...])

    # ---- combine: "(avg + res + 1) * 0.5" epilogue was folded into weights
    o_bck_ref[...] = x_avg + x_res


# ----------------------------------------------------------------------------
# Offline weight transformations (plain JAX, done once at init)
# ----------------------------------------------------------------------------
def _build_conv_unfold_matrix(conv_w, H, W):
    """Lower a 3x3 stride-1 'same' conv into a dense matmul matrix.

    conv_w: (KH, KW, Cin, Cout).
    Returns (Cin*H*W, Cout*H*W), row index = ci*H*W + hi*W + wi (CHW),
    column index = co*H*W + ho*W + wo (CHW) so the matmul output is already
    NCHW-flattened (zero padding realized via the equality masks).
    """
    KH, KW, Cin, Cout = conv_w.shape
    hh = jnp.arange(H)
    ww = jnp.arange(W)
    big = jnp.zeros((Cin * H * W, Cout * H * W), jnp.float32)
    for kh in range(KH):
        for kw in range(KW):
            dh = kh - (KH - 1) // 2
            dw = kw - (KW - 1) // 2
            sh = (hh[:, None] == (hh[None, :] + dh)).astype(jnp.float32)  # (H,H)
            sw = (ww[:, None] == (ww[None, :] + dw)).astype(jnp.float32)  # (W,W)
            spatial = jnp.kron(sh, sw)                                    # (HW,HW)
            big = big + jnp.kron(conv_w[kh, kw], spatial)
    return big


def _init_linear(key, fan_in, fan_out):
    kw, kb = jax.random.split(key)
    bound = 1.0 / jnp.sqrt(float(fan_in))
    w = jax.random.uniform(kw, (fan_in, fan_out), jnp.float32, -bound, bound)
    b = jax.random.uniform(kb, (1, fan_out), jnp.float32, -bound, bound)
    return w, b


def _init_mlp(key, dims):
    keys = jax.random.split(key, len(dims) - 1)
    return [_init_linear(k, fi, fo) for k, fi, fo in zip(keys, dims[:-1], dims[1:])]


def init_network_back(key, config):
    latent = config['latent_bck_size']
    c_img, h_img, w_img = config['image_shape']
    hw = h_img * w_img
    ks = jax.random.split(key, 5)

    # Encoder: hidden layers + two heads (equivalent to Linear(hidden, 2L)
    # followed by chunk(2, -1), but keeps mu/logvar lane-0 aligned in-kernel).
    enc_dims = [config['state_back_size']] + list(config['enc_bck_hidden'])
    enc_hidden = _init_mlp(ks[0], enc_dims)
    kh = jax.random.split(ks[1], 2)
    w_mu, b_mu = _init_linear(kh[0], enc_dims[-1], latent)
    w_lv, b_lv = _init_linear(kh[1], enc_dims[-1], latent)

    dec_avg = _init_mlp(ks[2], [latent]
                        + list(reversed(config['dec_bck_avg_hidden_rev']))
                        + [c_img])
    c0 = config['dec_bck_res_channel_rev'][-1]
    dec_res = _init_mlp(ks[3], [latent]
                        + list(reversed(config['dec_bck_res_hidden_rev']))
                        + [c0 * hw])
    kc = jax.random.split(ks[4])
    bound = 1.0 / jnp.sqrt(float(c0 * 9))
    conv_w = jax.random.uniform(kc[0], (3, 3, c0, c_img), jnp.float32,
                                -bound, bound)
    conv_b = jax.random.uniform(kc[1], (1, c_img), jnp.float32, -bound, bound)

    # Fold the x_avg[..., None, None] spatial broadcast (NCHW ordering) AND the
    # *0.5 epilogue scale into the last dec_avg layer.
    wa, ba = dec_avg[-1]
    dec_avg = dec_avg[:-1] + [(0.5 * jnp.repeat(wa, hw, axis=1),
                               0.5 * jnp.repeat(ba, hw, axis=1))]

    # Lower the 3x3 'same' conv into one dense matmul; fold *0.5 and the +0.5
    # constant of "(avg + res + 1) * 0.5" into its weight/bias.
    conv_big_w = 0.5 * _build_conv_unfold_matrix(conv_w, h_img, w_img)
    conv_big_b = 0.5 * jnp.repeat(conv_b, hw, axis=1) + 0.5
    # TODO(synk): this dense unfold matrix scales quartically in H*W; if
    # image_shape grows past ~16x16 replace it with 9 per-tap matmuls on
    # pltpu.roll'ed feature maps to stay inside v7x's 64 MiB VMEM.

    def bf16_w(layers):
        return [(w.astype(jnp.bfloat16), b) for w, b in layers]

    return {
        'enc_hidden': bf16_w(enc_hidden),
        'w_mu': w_mu.astype(jnp.bfloat16), 'b_mu': b_mu,
        'w_lv': w_lv.astype(jnp.bfloat16), 'b_lv': b_lv,
        'dec_avg': bf16_w(dec_avg),
        'dec_res': bf16_w(dec_res),
        'conv_big_w': conv_big_w.astype(jnp.bfloat16),
        'conv_big_b': conv_big_b,
        'prior_mu': jnp.zeros((1, latent), jnp.float32),
        'prior_logvar': jnp.zeros((1, latent), jnp.float32),
        'image_shape': (c_img, h_img, w_img),
        'latent': latent,
    }


# ----------------------------------------------------------------------------
# Forward pass: single fused pallas_call with a parallel batch grid
# ----------------------------------------------------------------------------
def network_back_forward(params, x, noise):
    c_img, h_img, w_img = params['image_shape']
    chw = c_img * h_img * w_img
    latent = params['latent']
    B, state_size = x.shape

    # Batch tile: multiples of 256 fill the MXU at production batch sizes;
    # small batches just round up to a sublane multiple of 8 (single step).
    TB = 256 if B >= 256 else _round_up(B, 8)
    B_pad = _round_up(B, TB)
    if B_pad != B:
        x = jnp.pad(x, ((0, B_pad - B), (0, 0)))
        noise = jnp.pad(noise, ((0, B_pad - B), (0, 0)))

    enc_hidden = params['enc_hidden']
    avg = params['dec_avg']
    res = params['dec_res']

    weight_args = [params['prior_mu'], params['prior_logvar']]
    for w, b in enc_hidden:
        weight_args += [w, b]
    weight_args += [params['w_mu'], params['b_mu'],
                    params['w_lv'], params['b_lv']]
    for w, b in avg + res:
        weight_args += [w, b]
    weight_args += [params['conv_big_w'], params['conv_big_b']]

    def batched(a):
        return pl.BlockSpec((TB, a.shape[1]), lambda i: (i, 0))

    def pinned(a):
        # Constant block index across the grid => weights stay VMEM-resident.
        return pl.BlockSpec(a.shape, lambda i: (0, 0))

    in_specs = [batched(x), batched(noise)] + [pinned(a) for a in weight_args]
    out_specs = (pl.BlockSpec((TB, chw), lambda i: (i, 0)),
                 pl.BlockSpec((TB, latent), lambda i: (i, 0)))

    kernel = functools.partial(_fused_kernel,
                               n_enc_hidden=len(enc_hidden),
                               n_avg=len(avg), n_res=len(res))

    bck_flat, kld_el = pl.pallas_call(
        kernel,
        grid=(B_pad // TB,),
        out_shape=(jax.ShapeDtypeStruct((B_pad, chw), jnp.float32),
                   jax.ShapeDtypeStruct((B_pad, latent), jnp.float32)),
        in_specs=in_specs,
        out_specs=out_specs,
        compiler_params=pltpu.CompilerParams(
            dimension_semantics=("parallel",)),
    )(x, noise, *weight_args)

    bck = bck_flat[:B].reshape(B, c_img, h_img, w_img)   # metadata reshape
    kld = kld_el[:B].sum(-1)                             # fused tiny reduction
    return {'bck': bck, 'bck_kld': kld}


# ----------------------------------------------------------------------------
if __name__ == "__main__":
    config = {
        'latent_bck_size': 8,
        'state_back_size': 16,
        'enc_bck_hidden': [32],
        'dec_bck_avg_hidden_rev': [16],
        'dec_bck_res_channel_rev': [8],
        'dec_bck_res_kernel_rev': [3],
        'dec_bck_res_stride_rev': [1],
        'dec_bck_res_hidden_rev': [32],
        'image_shape': (3, 8, 8),
    }

    key = jax.random.PRNGKey(0)
    k_param, k_x, k_noise = jax.random.split(key, 3)

    params = init_network_back(k_param, config)
    B = 2
    x = jax.random.normal(k_x, (B, config['state_back_size']), jnp.float32)
    # TODO(synk): torch.randn_like noise is non-deterministic in PyTorch; here
    # the Gaussian noise is drawn deterministically in the wrapper and fed to
    # the fused reparameterization step.
    noise = jax.random.normal(k_noise, (B, config['latent_bck_size']),
                              jnp.float32)

    out = network_back_forward(params, x, noise)
    jax.block_until_ready(out)

    assert out['bck'].shape == (B,) + tuple(config['image_shape'])
    assert out['bck_kld'].shape == (B,)
    assert bool(jnp.all(jnp.isfinite(out['bck'])))
    assert bool(jnp.all(jnp.isfinite(out['bck_kld'])))
    print("KERNEL_OK")
</pallas_src>

<mosaic_0001>
module attributes {stable_mosaic.version = 11 : i64} {
  func.func @_fused_kernel(%arg0: i32, %arg1: memref<8x16xf32, #tpu.memory_space<vmem>>, %arg2: memref<8x8xf32, #tpu.memory_space<vmem>>, %arg3: memref<1x8xf32, #tpu.memory_space<vmem>>, %arg4: memref<1x8xf32, #tpu.memory_space<vmem>>, %arg5: memref<16x32xbf16, #tpu.memory_space<vmem>>, %arg6: memref<1x32xf32, #tpu.memory_space<vmem>>, %arg7: memref<32x8xbf16, #tpu.memory_space<vmem>>, %arg8: memref<1x8xf32, #tpu.memory_space<vmem>>, %arg9: memref<32x8xbf16, #tpu.memory_space<vmem>>, %arg10: memref<1x8xf32, #tpu.memory_space<vmem>>, %arg11: memref<8x16xbf16, #tpu.memory_space<vmem>>, %arg12: memref<1x16xf32, #tpu.memory_space<vmem>>, %arg13: memref<16x192xbf16, #tpu.memory_space<vmem>>, %arg14: memref<1x192xf32, #tpu.memory_space<vmem>>, %arg15: memref<8x32xbf16, #tpu.memory_space<vmem>>, %arg16: memref<1x32xf32, #tpu.memory_space<vmem>>, %arg17: memref<32x512xbf16, #tpu.memory_space<vmem>>, %arg18: memref<1x512xf32, #tpu.memory_space<vmem>>, %arg19: memref<512x192xbf16, #tpu.memory_space<vmem>>, %arg20: memref<1x192xf32, #tpu.memory_space<vmem>>, %arg21: memref<8x192xf32, #tpu.memory_space<vmem>>, %arg22: memref<8x8xf32, #tpu.memory_space<vmem>>) attributes {dimension_semantics = [#tpu.dimension_semantics<parallel>], iteration_bounds = array<i64: 1>, scalar_prefetch = 0 : i64, scratch_operands = 0 : i64, tpu.core_type = #tpu.core_type<tc>, window_params = [{transform_indices = @transform_0, window_bounds = array<i64: 8, 16>}, {transform_indices = @transform_1, window_bounds = array<i64: 8, 8>}, {pipeline_mode = #tpu.pipeline_mode<synchronous>, transform_indices = @transform_2, window_bounds = array<i64: 1, 8>}, {pipeline_mode = #tpu.pipeline_mode<synchronous>, transform_indices = @transform_3, window_bounds = array<i64: 1, 8>}, {pipeline_mode = #tpu.pipeline_mode<synchronous>, transform_indices = @transform_4, window_bounds = array<i64: 16, 32>}, {pipeline_mode = #tpu.pipeline_mode<synchronous>, transform_indices = @transform_5, window_bounds = array<i64: 1, 32>}, {pipeline_mode = #tpu.pipeline_mode<synchronous>, transform_indices = @transform_6, window_bounds = array<i64: 32, 8>}, {pipeline_mode = #tpu.pipeline_mode<synchronous>, transform_indices = @transform_7, window_bounds = array<i64: 1, 8>}, {pipeline_mode = #tpu.pipeline_mode<synchronous>, transform_indices = @transform_8, window_bounds = array<i64: 32, 8>}, {pipeline_mode = #tpu.pipeline_mode<synchronous>, transform_indices = @transform_9, window_bounds = array<i64: 1, 8>}, {pipeline_mode = #tpu.pipeline_mode<synchronous>, transform_indices = @transform_10, window_bounds = array<i64: 8, 16>}, {pipeline_mode = #tpu.pipeline_mode<synchronous>, transform_indices = @transform_11, window_bounds = array<i64: 1, 16>}, {pipeline_mode = #tpu.pipeline_mode<synchronous>, transform_indices = @transform_12, window_bounds = array<i64: 16, 192>}, {pipeline_mode = #tpu.pipeline_mode<synchronous>, transform_indices = @transform_13, window_bounds = array<i64: 1, 192>}, {pipeline_mode = #tpu.pipeline_mode<synchronous>, transform_indices = @transform_14, window_bounds = array<i64: 8, 32>}, {pipeline_mode = #tpu.pipeline_mode<synchronous>, transform_indices = @transform_15, window_bounds = array<i64: 1, 32>}, {pipeline_mode = #tpu.pipeline_mode<synchronous>, transform_indices = @transform_16, window_bounds = array<i64: 32, 512>}, {pipeline_mode = #tpu.pipeline_mode<synchronous>, transform_indices = @transform_17, window_bounds = array<i64: 1, 512>}, {pipeline_mode = #tpu.pipeline_mode<synchronous>, transform_indices = @transform_18, window_bounds = array<i64: 512, 192>}, {pipeline_mode = #tpu.pipeline_mode<synchronous>, transform_indices = @transform_19, window_bounds = array<i64: 1, 192>}, {transform_indices = @transform_20, window_bounds = array<i64: 8, 192>}, {transform_indices = @transform_21, window_bounds = array<i64: 8, 8>}]} {
    %c0 = arith.constant 0 : index
    %c0_0 = arith.constant 0 : index
    %0 = vector.load %arg1[%c0, %c0_0] : memref<8x16xf32, #tpu.memory_space<vmem>>, vector<8x16xf32>
    %1 = arith.truncf %0 : vector<8x16xf32> to vector<8x16xbf16>
    %c0_1 = arith.constant 0 : index
    %c0_2 = arith.constant 0 : index
    %2 = vector.load %arg5[%c0_1, %c0_2] : memref<16x32xbf16, #tpu.memory_space<vmem>>, vector<16x32xbf16>
    %cst = arith.constant dense<0.000000e+00> : vector<8x32xf32>
    %3 = tpu.matmul %1, %2, %cst {dimension_numbers = #tpu.dot_dimension_numbers<[1], [0], [0], [1], [0, 0, 1, 1], [], []>} : vector<8x16xbf16>, vector<16x32xbf16>, vector<8x32xf32> -> vector<8x32xf32>
    %c0_3 = arith.constant 0 : index
    %c0_4 = arith.constant 0 : index
    %4 = vector.load %arg6[%c0_3, %c0_4] : memref<1x32xf32, #tpu.memory_space<vmem>>, vector<1x32xf32>
    %5 = vector.broadcast %4 : vector<1x32xf32> to vector<8x32xf32>
    %6 = arith.addf %3, %5 : vector<8x32xf32>
    %cst_5 = arith.constant 0.000000e+00 : f32
    %7 = vector.broadcast %cst_5 : f32 to vector<8x32xf32>
    %8 = arith.maximumf %6, %7 : vector<8x32xf32>
    %9 = arith.truncf %8 : vector<8x32xf32> to vector<8x32xbf16>
    %c0_6 = arith.constant 0 : index
    %c0_7 = arith.constant 0 : index
    %10 = vector.load %arg7[%c0_6, %c0_7] : memref<32x8xbf16, #tpu.memory_space<vmem>>, vector<32x8xbf16>
    %cst_8 = arith.constant dense<0.000000e+00> : vector<8x8xf32>
    %11 = tpu.matmul %9, %10, %cst_8 {dimension_numbers = #tpu.dot_dimension_numbers<[1], [0], [0], [1], [0, 0, 1, 1], [], []>} : vector<8x32xbf16>, vector<32x8xbf16>, vector<8x8xf32> -> vector<8x8xf32>
    %c0_9 = arith.constant 0 : index
    %c0_10 = arith.constant 0 : index
    %12 = vector.load %arg8[%c0_9, %c0_10] : memref<1x8xf32, #tpu.memory_space<vmem>>, vector<1x8xf32>
    %13 = vector.broadcast %12 : vector<1x8xf32> to vector<8x8xf32>
    %14 = arith.addf %11, %13 : vector<8x8xf32>
    %15 = arith.truncf %8 : vector<8x32xf32> to vector<8x32xbf16>
    %c0_11 = arith.constant 0 : index
    %c0_12 = arith.constant 0 : index
    %16 = vector.load %arg9[%c0_11, %c0_12] : memref<32x8xbf16, #tpu.memory_space<vmem>>, vector<32x8xbf16>
    %cst_13 = arith.constant dense<0.000000e+00> : vector<8x8xf32>
    %17 = tpu.matmul %15, %16, %cst_13 {dimension_numbers = #tpu.dot_dimension_numbers<[1], [0], [0], [1], [0, 0, 1, 1], [], []>} : vector<8x32xbf16>, vector<32x8xbf16>, vector<8x8xf32> -> vector<8x8xf32>
    %c0_14 = arith.constant 0 : index
    %c0_15 = arith.constant 0 : index
    %18 = vector.load %arg10[%c0_14, %c0_15] : memref<1x8xf32, #tpu.memory_space<vmem>>, vector<1x8xf32>
    %19 = vector.broadcast %18 : vector<1x8xf32> to vector<8x8xf32>
    %20 = arith.addf %17, %19 : vector<8x8xf32>
    %cst_16 = arith.constant 5.000000e-01 : f32
    %21 = vector.broadcast %cst_16 : f32 to vector<8x8xf32>
    %22 = arith.mulf %21, %20 : vector<8x8xf32>
    %23 = math.exp %22 : vector<8x8xf32>
    %c0_17 = arith.constant 0 : index
    %c0_18 = arith.constant 0 : index
    %24 = vector.load %arg2[%c0_17, %c0_18] : memref<8x8xf32, #tpu.memory_space<vmem>>, vector<8x8xf32>
    %25 = arith.mulf %23, %24 : vector<8x8xf32>
    %26 = arith.addf %14, %25 : vector<8x8xf32>
    %c0_19 = arith.constant 0 : index
    %c0_20 = arith.constant 0 : index
    %27 = vector.load %arg3[%c0_19, %c0_20] : memref<1x8xf32, #tpu.memory_space<vmem>>, vector<1x8xf32>
    %c0_21 = arith.constant 0 : index
    %c0_22 = arith.constant 0 : index
    %28 = vector.load %arg4[%c0_21, %c0_22] : memref<1x8xf32, #tpu.memory_space<vmem>>, vector<1x8xf32>
    %cst_23 = arith.constant 0.000000e+00 : f32
    %29 = vector.broadcast %cst_23 : f32 to vector<1x8xf32>
    %30 = arith.subf %29, %28 : vector<1x8xf32>
    %31 = math.exp %30 : vector<1x8xf32>
    %32 = vector.broadcast %28 : vector<1x8xf32> to vector<8x8xf32>
    %33 = arith.subf %32, %20 : vector<8x8xf32>
    %34 = vector.broadcast %27 : vector<1x8xf32> to vector<8x8xf32>
    %35 = arith.subf %14, %34 : vector<8x8xf32>
    %36 = arith.mulf %35, %35 : vector<8x8xf32>
    %37 = math.exp %20 : vector<8x8xf32>
    %38 = arith.addf %36, %37 : vector<8x8xf32>
    %39 = vector.broadcast %31 : vector<1x8xf32> to vector<8x8xf32>
    %40 = arith.mulf %39, %38 : vector<8x8xf32>
    %41 = arith.addf %33, %40 : vector<8x8xf32>
    %cst_24 = arith.constant 1.000000e+00 : f32
    %42 = vector.broadcast %cst_24 : f32 to vector<8x8xf32>
    %43 = arith.subf %41, %42 : vector<8x8xf32>
    %cst_25 = arith.constant 5.000000e-01 : f32
    %44 = vector.broadcast %cst_25 : f32 to vector<8x8xf32>
    %45 = arith.mulf %44, %43 : vector<8x8xf32>
    %c0_26 = arith.constant 0 : index
    %c0_27 = arith.constant 0 : index
    %46 = vector.load %arg22[%c0_26, %c0_27] : memref<8x8xf32, #tpu.memory_space<vmem>>, vector<8x8xf32>
    tpu.vector_store %arg22[%c0_26, %c0_27], %45 {strides = array<i32>} : memref<8x8xf32, #tpu.memory_space<vmem>>, vector<8x8xf32>,
    %47 = arith.truncf %26 : vector<8x8xf32> to vector<8x8xbf16>
    %c0_28 = arith.constant 0 : index
    %c0_29 = arith.constant 0 : index
    %48 = vector.load %arg11[%c0_28, %c0_29] : memref<8x16xbf16, #tpu.memory_space<vmem>>, vector<8x16xbf16>
    %cst_30 = arith.constant dense<0.000000e+00> : vector<8x16xf32>
    %49 = tpu.matmul %47, %48, %cst_30 {dimension_numbers = #tpu.dot_dimension_numbers<[1], [0], [0], [1], [0, 0, 1, 1], [], []>} : vector<8x8xbf16>, vector<8x16xbf16>, vector<8x16xf32> -> vector<8x16xf32>
    %c0_31 = arith.constant 0 : index
    %c0_32 = arith.constant 0 : index
    %50 = vector.load %arg12[%c0_31, %c0_32] : memref<1x16xf32, #tpu.memory_space<vmem>>, vector<1x16xf32>
    %51 = vector.broadcast %50 : vector<1x16xf32> to vector<8x16xf32>
    %52 = arith.addf %49, %51 : vector<8x16xf32>
    %cst_33 = arith.constant 0.000000e+00 : f32
    %53 = vector.broadcast %cst_33 : f32 to vector<8x16xf32>
    %54 = arith.maximumf %52, %53 : vector<8x16xf32>
    %55 = arith.truncf %54 : vector<8x16xf32> to vector<8x16xbf16>
    %c0_34 = arith.constant 0 : index
    %c0_35 = arith.constant 0 : index
    %56 = vector.load %arg13[%c0_34, %c0_35] : memref<16x192xbf16, #tpu.memory_space<vmem>>, vector<16x192xbf16>
    %cst_36 = arith.constant dense<0.000000e+00> : vector<8x192xf32>
    %57 = tpu.matmul %55, %56, %cst_36 {dimension_numbers = #tpu.dot_dimension_numbers<[1], [0], [0], [1], [0, 0, 1, 1], [], []>} : vector<8x16xbf16>, vector<16x192xbf16>, vector<8x192xf32> -> vector<8x192xf32>
    %c0_37 = arith.constant 0 : index
    %c0_38 = arith.constant 0 : index
    %58 = vector.load %arg14[%c0_37, %c0_38] : memref<1x192xf32, #tpu.memory_space<vmem>>, vector<1x192xf32>
    %59 = vector.broadcast %58 : vector<1x192xf32> to vector<8x192xf32>
    %60 = arith.addf %57, %59 : vector<8x192xf32>
    %61 = arith.truncf %26 : vector<8x8xf32> to vector<8x8xbf16>
    %c0_39 = arith.constant 0 : index
    %c0_40 = arith.constant 0 : index
    %62 = vector.load %arg15[%c0_39, %c0_40] : memref<8x32xbf16, #tpu.memory_space<vmem>>, vector<8x32xbf16>
    %cst_41 = arith.constant dense<0.000000e+00> : vector<8x32xf32>
    %63 = tpu.matmul %61, %62, %cst_41 {dimension_numbers = #tpu.dot_dimension_numbers<[1], [0], [0], [1], [0, 0, 1, 1], [], []>} : vector<8x8xbf16>, vector<8x32xbf16>, vector<8x32xf32> -> vector<8x32xf32>
    %c0_42 = arith.constant 0 : index
    %c0_43 = arith.constant 0 : index
    %64 = vector.load %arg16[%c0_42, %c0_43] : memref<1x32xf32, #tpu.memory_space<vmem>>, vector<1x32xf32>
    %65 = vector.broadcast %64 : vector<1x32xf32> to vector<8x32xf32>
    %66 = arith.addf %63, %65 : vector<8x32xf32>
    %cst_44 = arith.constant 0.000000e+00 : f32
    %67 = vector.broadcast %cst_44 : f32 to vector<8x32xf32>
    %68 = arith.maximumf %66, %67 : vector<8x32xf32>
    %69 = arith.truncf %68 : vector<8x32xf32> to vector<8x32xbf16>
    %c0_45 = arith.constant 0 : index
    %c0_46 = arith.constant 0 : index
    %70 = vector.load %arg17[%c0_45, %c0_46] : memref<32x512xbf16, #tpu.memory_space<vmem>>, vector<32x512xbf16>
    %cst_47 = arith.constant dense<0.000000e+00> : vector<8x512xf32>
    %71 = tpu.matmul %69, %70, %cst_47 {dimension_numbers = #tpu.dot_dimension_numbers<[1], [0], [0], [1], [0, 0, 1, 1], [], []>} : vector<8x32xbf16>, vector<32x512xbf16>, vector<8x512xf32> -> vector<8x512xf32>
    %c0_48 = arith.constant 0 : index
    %c0_49 = arith.constant 0 : index
    %72 = vector.load %arg18[%c0_48, %c0_49] : memref<1x512xf32, #tpu.memory_space<vmem>>, vector<1x512xf32>
    %73 = vector.broadcast %72 : vector<1x512xf32> to vector<8x512xf32>
    %74 = arith.addf %71, %73 : vector<8x512xf32>
    %cst_50 = arith.constant 0.000000e+00 : f32
    %75 = vector.broadcast %cst_50 : f32 to vector<8x512xf32>
    %76 = arith.maximumf %74, %75 : vector<8x512xf32>
    %77 = arith.truncf %76 : vector<8x512xf32> to vector<8x512xbf16>
    %c0_51 = arith.constant 0 : index
    %c0_52 = arith.constant 0 : index
    %78 = vector.load %arg19[%c0_51, %c0_52] : memref<512x192xbf16, #tpu.memory_space<vmem>>, vector<512x192xbf16>
    %cst_53 = arith.constant dense<0.000000e+00> : vector<8x192xf32>
    %79 = tpu.matmul %77, %78, %cst_53 {dimension_numbers = #tpu.dot_dimension_numbers<[1], [0], [0], [1], [0, 0, 1, 1], [], []>} : vector<8x512xbf16>, vector<512x192xbf16>, vector<8x192xf32> -> vector<8x192xf32>
    %c0_54 = arith.constant 0 : index
    %c0_55 = arith.constant 0 : index
    %80 = vector.load %arg20[%c0_54, %c0_55] : memref<1x192xf32, #tpu.memory_space<vmem>>, vector<1x192xf32>
    %81 = vector.broadcast %80 : vector<1x192xf32> to vector<8x192xf32>
    %82 = arith.addf %79, %81 : vector<8x192xf32>
    %83 = arith.addf %60, %82 : vector<8x192xf32>
    %c0_56 = arith.constant 0 : index
    %c0_57 = arith.constant 0 : index
    %84 = vector.load %arg21[%c0_56, %c0_57] : memref<8x192xf32, #tpu.memory_space<vmem>>, vector<8x192xf32>
    tpu.vector_store %arg21[%c0_56, %c0_57], %83 {strides = array<i32>} : memref<8x192xf32, #tpu.memory_space<vmem>>, vector<8x192xf32>,
    return
  }
  func.func @transform_0(%arg0: i32) -> (i32, i32) {
    %c0_i32 = arith.constant 0 : i32
    %c0_i32_0 = arith.constant 0 : i32
    return %arg0, %c0_i32 : i32, i32
  }
  func.func @transform_1(%arg0: i32) -> (i32, i32) {
    %c0_i32 = arith.constant 0 : i32
    %c0_i32_0 = arith.constant 0 : i32
    return %arg0, %c0_i32 : i32, i32
  }
  func.func @transform_2(%arg0: i32) -> (i32, i32) {
    %c0_i32 = arith.constant 0 : i32
    %c0_i32_0 = arith.constant 0 : i32
    %c0_i32_1 = arith.constant 0 : i32
    return %c0_i32, %c0_i32_0 : i32, i32
  }
  func.func @transform_3(%arg0: i32) -> (i32, i32) {
    %c0_i32 = arith.constant 0 : i32
    %c0_i32_0 = arith.constant 0 : i32
    %c0_i32_1 = arith.constant 0 : i32
    return %c0_i32, %c0_i32_0 : i32, i32
  }
  func.func @transform_4(%arg0: i32) -> (i32, i32) {
    %c0_i32 = arith.constant 0 : i32
    %c0_i32_0 = arith.constant 0 : i32
    %c0_i32_1 = arith.constant 0 : i32
    return %c0_i32, %c0_i32_0 : i32, i32
  }
  func.func @transform_5(%arg0: i32) -> (i32, i32) {
    %c0_i32 = arith.constant 0 : i32
    %c0_i32_0 = arith.constant 0 : i32
    %c0_i32_1 = arith.constant 0 : i32
    return %c0_i32, %c0_i32_0 : i32, i32
  }
  func.func @transform_6(%arg0: i32) -> (i32, i32) {
    %c0_i32 = arith.constant 0 : i32
    %c0_i32_0 = arith.constant 0 : i32
    %c0_i32_1 = arith.constant 0 : i32
    return %c0_i32, %c0_i32_0 : i32, i32
  }
  func.func @transform_7(%arg0: i32) -> (i32, i32) {
    %c0_i32 = arith.constant 0 : i32
    %c0_i32_0 = arith.constant 0 : i32
    %c0_i32_1 = arith.constant 0 : i32
    return %c0_i32, %c0_i32_0 : i32, i32
  }
  func.func @transform_8(%arg0: i32) -> (i32, i32) {
    %c0_i32 = arith.constant 0 : i32
    %c0_i32_0 = arith.constant 0 : i32
    %c0_i32_1 = arith.constant 0 : i32
    return %c0_i32, %c0_i32_0 : i32, i32
  }
  func.func @transform_9(%arg0: i32) -> (i32, i32) {
    %c0_i32 = arith.constant 0 : i32
    %c0_i32_0 = arith.constant 0 : i32
    %c0_i32_1 = arith.constant 0 : i32
    return %c0_i32, %c0_i32_0 : i32, i32
  }
  func.func @transform_10(%arg0: i32) -> (i32, i32) {
    %c0_i32 = arith.constant 0 : i32
    %c0_i32_0 = arith.constant 0 : i32
    %c0_i32_1 = arith.constant 0 : i32
    return %c0_i32, %c0_i32_0 : i32, i32
  }
  func.func @transform_11(%arg0: i32) -> (i32, i32) {
    %c0_i32 = arith.constant 0 : i32
    %c0_i32_0 = arith.constant 0 : i32
    %c0_i32_1 = arith.constant 0 : i32
    return %c0_i32, %c0_i32_0 : i32, i32
  }
  func.func @transform_12(%arg0: i32) -> (i32, i32) {
    %c0_i32 = arith.constant 0 : i32
    %c0_i32_0 = arith.constant 0 : i32
    %c0_i32_1 = arith.constant 0 : i32
    return %c0_i32, %c0_i32_0 : i32, i32
  }
  func.func @transform_13(%arg0: i32) -> (i32, i32) {
    %c0_i32 = arith.constant 0 : i32
    %c0_i32_0 = arith.constant 0 : i32
    %c0_i32_1 = arith.constant 0 : i32
    return %c0_i32, %c0_i32_0 : i32, i32
  }
  func.func @transform_14(%arg0: i32) -> (i32, i32) {
    %c0_i32 = arith.constant 0 : i32
    %c0_i32_0 = arith.constant 0 : i32
    %c0_i32_1 = arith.constant 0 : i32
    return %c0_i32, %c0_i32_0 : i32, i32
  }
  func.func @transform_15(%arg0: i32) -> (i32, i32) {
    %c0_i32 = arith.constant 0 : i32
    %c0_i32_0 = arith.constant 0 : i32
    %c0_i32_1 = arith.constant 0 : i32
    return %c0_i32, %c0_i32_0 : i32, i32
  }
  func.func @transform_16(%arg0: i32) -> (i32, i32) {
    %c0_i32 = arith.constant 0 : i32
    %c0_i32_0 = arith.constant 0 : i32
    %c0_i32_1 = arith.constant 0 : i32
    return %c0_i32, %c0_i32_0 : i32, i32
  }
  func.func @transform_17(%arg0: i32) -> (i32, i32) {
    %c0_i32 = arith.constant 0 : i32
    %c0_i32_0 = arith.constant 0 : i32
    %c0_i32_1 = arith.constant 0 : i32
    return %c0_i32, %c0_i32_0 : i32, i32
  }
  func.func @transform_18(%arg0: i32) -> (i32, i32) {
    %c0_i32 = arith.constant 0 : i32
    %c0_i32_0 = arith.constant 0 : i32
    %c0_i32_1 = arith.constant 0 : i32
    return %c0_i32, %c0_i32_0 : i32, i32
  }
  func.func @transform_19(%arg0: i32) -> (i32, i32) {
    %c0_i32 = arith.constant 0 : i32
    %c0_i32_0 = arith.constant 0 : i32
    %c0_i32_1 = arith.constant 0 : i32
    return %c0_i32, %c0_i32_0 : i32, i32
  }
  func.func @transform_20(%arg0: i32) -> (i32, i32) {
    %c0_i32 = arith.constant 0 : i32
    %c0_i32_0 = arith.constant 0 : i32
    return %arg0, %c0_i32 : i32, i32
  }
  func.func @transform_21(%arg0: i32) -> (i32, i32) {
    %c0_i32 = arith.constant 0 : i32
    %c0_i32_0 = arith.constant 0 : i32
    return %arg0, %c0_i32 : i32, i32
  }
}

</mosaic_0001>

<llo_original>
// kernel: tpu_custom_call.1
$region0: #{tpu_custom_call.1}
  #allocation0 [shape = 'u32[]', space=smem, size = 0x4, offset = 0x4, fixed_abs, tag = 'smem constant byte address 0x4 - core index']
  #allocation1 [shape = 'u32[144,128]{1,0:T(1,128)}', space=vmem, size = 0x12000, scoped, tag = 'internal scratch']
  %s0 = inlined_call_operand.vmem [shape: f32[8,16], index: 0, kind: input, shape index: {}]
  %s1 = inlined_call_operand.vmem [shape: f32[8,8], index: 1, kind: input, shape index: {}]
  %s2 = inlined_call_operand.vmem [shape: f32[1,8], index: 2, kind: input, shape index: {}]
  %s3 = inlined_call_operand.vmem [shape: f32[1,8], index: 3, kind: input, shape index: {}]
  %s4 = inlined_call_operand.vmem [shape: bf16[16,32], index: 4, kind: input, shape index: {}]
  %s5 = inlined_call_operand.vmem [shape: f32[1,32], index: 5, kind: input, shape index: {}]
  %s6 = inlined_call_operand.vmem [shape: bf16[32,8], index: 6, kind: input, shape index: {}]
  %s7 = inlined_call_operand.vmem [shape: f32[1,8], index: 7, kind: input, shape index: {}]
  %s8 = inlined_call_operand.vmem [shape: bf16[32,8], index: 8, kind: input, shape index: {}]
  %s9 = inlined_call_operand.vmem [shape: f32[1,8], index: 9, kind: input, shape index: {}]
  %s10 = inlined_call_operand.vmem [shape: bf16[8,16], index: 10, kind: input, shape index: {}]
  %s11 = inlined_call_operand.vmem [shape: f32[1,16], index: 11, kind: input, shape index: {}]
  %s12 = inlined_call_operand.vmem [shape: bf16[16,192], index: 12, kind: input, shape index: {}]
  %s13 = inlined_call_operand.vmem [shape: f32[1,192], index: 13, kind: input, shape index: {}]
  %s14 = inlined_call_operand.vmem [shape: bf16[8,32], index: 14, kind: input, shape index: {}]
  %s15 = inlined_call_operand.vmem [shape: f32[1,32], index: 15, kind: input, shape index: {}]
  %s16 = inlined_call_operand.vmem [shape: bf16[32,512], index: 16, kind: input, shape index: {}]
  %s17 = inlined_call_operand.vmem [shape: f32[1,512], index: 17, kind: input, shape index: {}]
  %s18 = inlined_call_operand.vmem [shape: bf16[512,192], index: 18, kind: input, shape index: {}]
  %s19 = inlined_call_operand.vmem [shape: f32[1,192], index: 19, kind: input, shape index: {}]
  %s20 = inlined_call_operand.hbm [shape: f32[8,192], index: 20, kind: output, shape index: {0}]
  %s21 = inlined_call_operand.hbm [shape: f32[8,8], index: 21, kind: output, shape index: {1}]
  %22 = xla_tuple %s20, %s21
  %s23 = sld [smem:[#allocation0]]
  $region98: #{tpu_custom_call.1} parent=0
    _
  %s25 = ssub.s32 1, %s23
  %s26 = scalar_select 0, %s25, %s23
  $region1: #{tpu_custom_call.1} parent=0
    #allocation2 [shape = 'u8[8192]{0}', space=vmem, size = 0x2000, scoped, tag = 'output window, operand 0, single buffered']
    #allocation3 [shape = 's32[1]{0}', space=sflag, size = 0x4, scoped, tag = 'scoped memory for tpu_custom_call.1']
    #allocation4 [shape = 'u8[4096]{0}', space=vmem, size = 0x1000, scoped, tag = 'output window, operand 1, single buffered']
    #allocation5 [shape = 's32[1]{0}', space=sflag, size = 0x4, scoped, tag = 'scoped memory for tpu_custom_call.1']
    %27 = vsyncpa [#allocation3], 0
    %28 = vsyncpa [#allocation5], 0
    // Predicated region
    $region2: #{tpu_custom_call.1} parent=1 // pred_check
      _
    $region3: #{tpu_custom_call.1} parent=1 // pred_check_branch
      %30 = sbr.rel (0) target = $region5
    $region4: #{tpu_custom_call.1} parent=1 // pred_region
      _
    $region5: #{tpu_custom_call.1} parent=1 // pred_fallthru
      _
    // Predicated region
    $region6: #{tpu_custom_call.1} parent=1 // pred_check
      _
    $region7: #{tpu_custom_call.1} parent=1 // pred_check_branch
      %32 = sbr.rel (0) target = $region9
    $region8: #{tpu_custom_call.1} parent=1 // pred_region
      _
    $region9: #{tpu_custom_call.1} parent=1 // pred_fallthru
      _
    // Predicated region
    $region10: #{tpu_custom_call.1} parent=1 // pred_check
      _
    $region11: #{tpu_custom_call.1} parent=1 // pred_check_branch
      %34 = sbr.rel (0) target = $region13
    $region12: #{tpu_custom_call.1} parent=1 // pred_region
      _
    $region13: #{tpu_custom_call.1} parent=1 // pred_fallthru
      _
    // Predicated region
    $region14: #{tpu_custom_call.1} parent=1 // pred_check
      _
    $region15: #{tpu_custom_call.1} parent=1 // pred_check_branch
      %36 = sbr.rel (0) target = $region17
    $region16: #{tpu_custom_call.1} parent=1 // pred_region
      _
    $region17: #{tpu_custom_call.1} parent=1 // pred_fallthru
      _
    // Predicated region
    $region18: #{tpu_custom_call.1} parent=1 // pred_check
      _
    $region19: #{tpu_custom_call.1} parent=1 // pred_check_branch
      %38 = sbr.rel (0) target = $region21
    $region20: #{tpu_custom_call.1} parent=1 // pred_region
      _
    $region21: #{tpu_custom_call.1} parent=1 // pred_fallthru
      _
    // Predicated region
    $region22: #{tpu_custom_call.1} parent=1 // pred_check
      _
    $region23: #{tpu_custom_call.1} parent=1 // pred_check_branch
      %40 = sbr.rel (0) target = $region25
    $region24: #{tpu_custom_call.1} parent=1 // pred_region
      _
    $region25: #{tpu_custom_call.1} parent=1 // pred_fallthru
      _
    // Predicated region
    $region26: #{tpu_custom_call.1} parent=1 // pred_check
      _
    $region27: #{tpu_custom_call.1} parent=1 // pred_check_branch
      %42 = sbr.rel (0) target = $region29
    $region28: #{tpu_custom_call.1} parent=1 // pred_region
      _
    $region29: #{tpu_custom_call.1} parent=1 // pred_fallthru
      _
    // Predicated region
    $region30: #{tpu_custom_call.1} parent=1 // pred_check
      _
    $region31: #{tpu_custom_call.1} parent=1 // pred_check_branch
      %44 = sbr.rel (0) target = $region33
    $region32: #{tpu_custom_call.1} parent=1 // pred_region
      _
    $region33: #{tpu_custom_call.1} parent=1 // pred_fallthru
      _
    // Predicated region
    $region34: #{tpu_custom_call.1} parent=1 // pred_check
      _
    $region35: #{tpu_custom_call.1} parent=1 // pred_check_branch
      %46 = sbr.rel (0) target = $region37
    $region36: #{tpu_custom_call.1} parent=1 // pred_region
      _
    $region37: #{tpu_custom_call.1} parent=1 // pred_fallthru
      _
    // Predicated region
    $region38: #{tpu_custom_call.1} parent=1 // pred_check
      _
    $region39: #{tpu_custom_call.1} parent=1 // pred_check_branch
      %48 = sbr.rel (0) target = $region41
    $region40: #{tpu_custom_call.1} parent=1 // pred_region
      _
    $region41: #{tpu_custom_call.1} parent=1 // pred_fallthru
      _
    // Predicated region
    $region42: #{tpu_custom_call.1} parent=1 // pred_check
      _
    $region43: #{tpu_custom_call.1} parent=1 // pred_check_branch
      %50 = sbr.rel (0) target = $region45
    $region44: #{tpu_custom_call.1} parent=1 // pred_region
      _
    $region45: #{tpu_custom_call.1} parent=1 // pred_fallthru
      _
    // Predicated region
    $region46: #{tpu_custom_call.1} parent=1 // pred_check
      _
    $region47: #{tpu_custom_call.1} parent=1 // pred_check_branch
      %52 = sbr.rel (0) target = $region49
    $region48: #{tpu_custom_call.1} parent=1 // pred_region
      _
    $region49: #{tpu_custom_call.1} parent=1 // pred_fallthru
      _
    // Predicated region
    $region50: #{tpu_custom_call.1} parent=1 // pred_check
      _
    $region51: #{tpu_custom_call.1} parent=1 // pred_check_branch
      %54 = sbr.rel (0) target = $region53
    $region52: #{tpu_custom_call.1} parent=1 // pred_region
      _
    $region53: #{tpu_custom_call.1} parent=1 // pred_fallthru
      _
    // Predicated region
    $region54: #{tpu_custom_call.1} parent=1 // pred_check
      _
    $region55: #{tpu_custom_call.1} parent=1 // pred_check_branch
      %56 = sbr.rel (0) target = $region57
    $region56: #{tpu_custom_call.1} parent=1 // pred_region
      _
    $region57: #{tpu_custom_call.1} parent=1 // pred_fallthru
      _
    // Predicated region
    $region58: #{tpu_custom_call.1} parent=1 // pred_check
      _
    $region59: #{tpu_custom_call.1} parent=1 // pred_check_branch
      %58 = sbr.rel (0) target = $region61
    $region60: #{tpu_custom_call.1} parent=1 // pred_region
      _
    $region61: #{tpu_custom_call.1} parent=1 // pred_fallthru
      _
    // Predicated region
    $region62: #{tpu_custom_call.1} parent=1 // pred_check
      _
    $region63: #{tpu_custom_call.1} parent=1 // pred_check_branch
      %60 = sbr.rel (0) target = $region65
    $region64: #{tpu_custom_call.1} parent=1 // pred_region
      _
    $region65: #{tpu_custom_call.1} parent=1 // pred_fallthru
      _
    // Predicated region
    $region66: #{tpu_custom_call.1} parent=1 // pred_check
      _
    $region67: #{tpu_custom_call.1} parent=1 // pred_check_branch
      %62 = sbr.rel (0) target = $region69
    $region68: #{tpu_custom_call.1} parent=1 // pred_region
      _
    $region69: #{tpu_custom_call.1} parent=1 // pred_fallthru
      _
    // Predicated region
    $region70: #{tpu_custom_call.1} parent=1 // pred_check
      _
    $region71: #{tpu_custom_call.1} parent=1 // pred_check_branch
      %64 = sbr.rel (0) target = $region73
    $region72: #{tpu_custom_call.1} parent=1 // pred_region
      _
    $region73: #{tpu_custom_call.1} parent=1 // pred_fallthru
      _
    // Predicated region
    $region74: #{tpu_custom_call.1} parent=1 // pred_check
      _
    $region75: #{tpu_custom_call.1} parent=1 // pred_check_branch
      %66 = sbr.rel (0) target = $region77
    $region76: #{tpu_custom_call.1} parent=1 // pred_region
      _
    $region77: #{tpu_custom_call.1} parent=1 // pred_fallthru
      _
    // Predicated region
    $region78: #{tpu_custom_call.1} parent=1 // pred_check
      _
    $region79: #{tpu_custom_call.1} parent=1 // pred_check_branch
      %68 = sbr.rel (0) target = $region81
    $region80: #{tpu_custom_call.1} parent=1 // pred_region
      _
    $region81: #{tpu_custom_call.1} parent=1 // pred_fallthru
      _
    %v70 = vld [vmem:[%s0] sm:$0xff]
    %v71 = vpack.c.bf16 %v70, %v70
    %v72 = vld [vmem:[%s4] sm:$0xf]
    %v73 = vld [vmem:[%s4 + $0x4] sm:$0xf]
    %v74 = vld [vmem:[%s5] sm:$0x1]
    %v76 = vlaneseq
    %v77 = vshrl.u32 %v76, 7
    %v78 = vsub.s32 0, %v77
    %v79 = vrot.slane %v74, %v78
    %v83 = vunpack.c.l.b16 %v72
    %v84 = vunpack.c.l.b16 %v73
    %v85 = vpack.c.b16 %v84, %v83
    %vm87 = vcmask 130048
    %v89 = vsel %vm87, %v71, 0
    %91 = vmatprep.subr.bf16.mxu0 0
    %92 = vmatpush1.bf16.msra.mxu0 %v85
    %93 = vmatprep.subr.bf16.mxu0 0
    %94 = vmatpush1.bf16.msra.mxu0 0
    %95 = vmatprep.subr.bf16.mxu0 0
    %96 = vmatpush1.bf16.msra.mxu0 0
    %97 = vmatprep.subr.bf16.mxu0 0
    %98 = vmatpush1.bf16.msra.mxu0 0
    %99 = vmatprep.subr.bf16.mxu0 0
    %100 = vmatpush1.bf16.msra.mxu0 0
    %101 = vmatprep.subr.bf16.mxu0 0
    %102 = vmatpush1.bf16.msra.mxu0 0
    %103 = vmatprep.subr.bf16.mxu0 0
    %104 = vmatpush1.bf16.msra.mxu0 0
    %105 = vmatprep.subr.bf16.mxu0 0
    %106 = vmatpush1.bf16.msra.mxu0 0
    %107 = vmatprep.subr.bf16.mxu0 0
    %108 = vmatpush1.bf16.msra.mxu0 0
    %109 = vmatprep.subr.bf16.mxu0 0
    %110 = vmatpush1.bf16.msra.mxu0 0
    %111 = vmatprep.subr.bf16.mxu0 0
    %112 = vmatpush1.bf16.msra.mxu0 0
    %113 = vmatprep.subr.bf16.mxu0 0
    %114 = vmatpush1.bf16.msra.mxu0 0
    %115 = vmatprep.subr.bf16.mxu0 0
    %116 = vmatpush1.bf16.msra.mxu0 0
    %117 = vmatprep.subr.bf16.mxu0 0
    %118 = vmatpush1.bf16.msra.mxu0 0
    %119 = vmatprep.subr.bf16.mxu0 0
    %120 = vmatpush1.bf16.msra.mxu0 0
    %121 = vmatprep.subr.bf16.mxu0 0
    %122 = vmatpush1.bf16.msra.mxu0 0
    %123 = vmatprep.mubr.bf16.mxu0 0
    %124 = vmatmul.mubr.bf16.gmra.mrb[0].mxu0 %v89
    %v125 = vpop.f32.mrb[0].mxu0
    %v126 = vadd.f32 %v79, %v125
    %v127 = vpop.f32.mrb[0].mxu0
    %v128 = vpop.f32.mrb[0].mxu0
    %v129 = vpop.f32.mrb[0].mxu0
    %130 = vdwg.mxu0
    %v131 = vmax.f32 %v126, 0.0
    %v132 = vpack.c.bf16 %v131, %v131
    %v133 = vld [vmem:[%s6] sm:$0xf]
    %v134 = vld [vmem:[%s6 + $0x4] sm:$0xf]
    %v135 = vld [vmem:[%s6 + $0x8] sm:$0xf]
    %v136 = vld [vmem:[%s6 + $0xc] sm:$0xf]
    %v137 = vld [vmem:[%s7] sm:$0x1]
    %v139 = vlaneseq
    %v140 = vshrl.u32 %v139, 7
    %v141 = vsub.s32 0, %v140
    %v142 = vrot.slane %v137, %v141
    %v148 = vunpack.c.l.b16 %v133
    %v149 = vunpack.c.l.b16 %v134
    %v150 = vunpack.c.l.b16 %v135
    %v151 = vunpack.c.l.b16 %v136
    %v152 = vpack.c.b16 %v149, %v148
    %v153 = vpack.c.b16 %v151, %v150
    %vm156 = vcmask 261120
    %v158 = vsel %vm156, %v132, 0
    %160 = vmatprep.subr.bf16.mxu0 0
    %161 = vmatpush1.bf16.msra.mxu0 %v152
    %162 = vmatprep.subr.bf16.mxu0 0
    %163 = vmatpush1.bf16.msra.mxu0 %v153
    %164 = vmatprep.subr.bf16.mxu0 0
    %165 = vmatpush1.bf16.msra.mxu0 0
    %166 = vmatprep.subr.bf16.mxu0 0
    %167 = vmatpush1.bf16.msra.mxu0 0
    %168 = vmatprep.subr.bf16.mxu0 0
    %169 = vmatpush1.bf16.msra.mxu0 0
    %170 = vmatprep.subr.bf16.mxu0 0
    %171 = vmatpush1.bf16.msra.mxu0 0
    %172 = vmatprep.subr.bf16.mxu0 0
    %173 = vmatpush1.bf16.msra.mxu0 0
    %174 = vmatprep.subr.bf16.mxu0 0
    %175 = vmatpush1.bf16.msra.mxu0 0
    %176 = vmatprep.subr.bf16.mxu0 0
    %177 = vmatpush1.bf16.msra.mxu0 0
    %178 = vmatprep.subr.bf16.mxu0 0
    %179 = vmatpush1.bf16.msra.mxu0 0
    %180 = vmatprep.subr.bf16.mxu0 0
    %181 = vmatpush1.bf16.msra.mxu0 0
    %182 = vmatprep.subr.bf16.mxu0 0
    %183 = vmatpush1.bf16.msra.mxu0 0
    %184 = vmatprep.subr.bf16.mxu0 0
    %185 = vmatpush1.bf16.msra.mxu0 0
    %186 = vmatprep.subr.bf16.mxu0 0
    %187 = vmatpush1.bf16.msra.mxu0 0
    %188 = vmatprep.subr.bf16.mxu0 0
    %189 = vmatpush1.bf16.msra.mxu0 0
    %190 = vmatprep.subr.bf16.mxu0 0
    %191 = vmatpush1.bf16.msra.mxu0 0
    %192 = vmatprep.mubr.bf16.mxu0 0
    %193 = vmatmul.mubr.bf16.gmra.mrb[0].mxu0 %v158
    %v194 = vpop.f32.mrb[0].mxu0
    %v195 = vadd.f32 %v142, %v194
    %v196 = vpop.f32.mrb[0].mxu0
    %v197 = vpop.f32.mrb[0].mxu0
    %v198 = vpop.f32.mrb[0].mxu0
    %199 = vdwg.mxu0
    %v200 = vld [vmem:[%s8] sm:$0xf]
    %v201 = vld [vmem:[%s8 + $0x4] sm:$0xf]
    %v202 = vld [vmem:[%s8 + $0x8] sm:$0xf]
    %v203 = vld [vmem:[%s8 + $0xc] sm:$0xf]
    %v204 = vld [vmem:[%s9] sm:$0x1]
    %v206 = vlaneseq
    %v207 = vshrl.u32 %v206, 7
    %v208 = vsub.s32 0, %v207
    %v209 = vrot.slane %v204, %v208
    %v215 = vunpack.c.l.b16 %v200
    %v216 = vunpack.c.l.b16 %v201
    %v217 = vunpack.c.l.b16 %v202
    %v218 = vunpack.c.l.b16 %v203
    %v219 = vpack.c.b16 %v216, %v215
    %v220 = vpack.c.b16 %v218, %v217
    %223 = vmatprep.subr.bf16.mxu0 0
    %224 = vmatpush1.bf16.msra.mxu0 %v219
    %225 = vmatprep.subr.bf16.mxu0 0
    %226 = vmatpush1.bf16.msra.mxu0 %v220
    %227 = vmatprep.subr.bf16.mxu0 0
    %228 = vmatpush1.bf16.msra.mxu0 0
    %229 = vmatprep.subr.bf16.mxu0 0
    %230 = vmatpush1.bf16.msra.mxu0 0
    %231 = vmatprep.subr.bf16.mxu0 0
    %232 = vmatpush1.bf16.msra.mxu0 0
    %233 = vmatprep.subr.bf16.mxu0 0
    %234 = vmatpush1.bf16.msra.mxu0 0
    %235 = vmatprep.subr.bf16.mxu0 0
    %236 = vmatpush1.bf16.msra.mxu0 0
    %237 = vmatprep.subr.bf16.mxu0 0
    %238 = vmatpush1.bf16.msra.mxu0 0
    %239 = vmatprep.subr.bf16.mxu0 0
    %240 = vmatpush1.bf16.msra.mxu0 0
    %241 = vmatprep.subr.bf16.mxu0 0
    %242 = vmatpush1.bf16.msra.mxu0 0
    %243 = vmatprep.subr.bf16.mxu0 0
    %244 = vmatpush1.bf16.msra.mxu0 0
    %245 = vmatprep.subr.bf16.mxu0 0
    %246 = vmatpush1.bf16.msra.mxu0 0
    %247 = vmatprep.subr.bf16.mxu0 0
    %248 = vmatpush1.bf16.msra.mxu0 0
    %249 = vmatprep.subr.bf16.mxu0 0
    %250 = vmatpush1.bf16.msra.mxu0 0
    %251 = vmatprep.subr.bf16.mxu0 0
    %252 = vmatpush1.bf16.msra.mxu0 0
    %253 = vmatprep.subr.bf16.mxu0 0
    %254 = vmatpush1.bf16.msra.mxu0 0
    %255 = vmatprep.mubr.bf16.mxu0 0
    %256 = vmatmul.mubr.bf16.gmra.mrb[0].mxu0 %v158
    %v257 = vpop.f32.mrb[0].mxu0
    %v258 = vadd.f32 %v209, %v257
    %v259 = vpop.f32.mrb[0].mxu0
    %v260 = vpop.f32.mrb[0].mxu0
    %v261 = vpop.f32.mrb[0].mxu0
    %262 = vdwg.mxu0
    %v263 = vmul.f32 %v258, 0.5
    %v264 = vmul.f32 %v263, 1.442695
    %v265 = vpow.pop %v264
    %v266 = vld [vmem:[%s1] sm:$0xff]
    %v267 = vmul.f32 %v265, %v266
    %v268 = vadd.f32 %v195, %v267
    %v269 = vld [vmem:[%s2] sm:$0x1]
    %v270 = vld [vmem:[%s3] sm:$0x1]
    %v271 = vsub.f32 0.0, %v270
    %v272 = vmul.f32 %v271, 1.442695
    %v273 = vpow.pop %v272
    %v275 = vlaneseq
    %v276 = vshrl.u32 %v275, 7
    %v277 = vsub.s32 0, %v276
    %v278 = vrot.slane %v270, %v277
    %v280 = vsub.f32 %v278, %v258
    %v282 = vlaneseq
    %v283 = vshrl.u32 %v282, 7
    %v284 = vsub.s32 0, %v283
    %v285 = vrot.slane %v269, %v284
    %v287 = vsub.f32 %v195, %v285
    %v288 = vmul.f32 %v287, %v287
    %v289 = vmul.f32 %v258, 1.442695
    %v290 = vpow.pop %v289
    %v291 = vadd.f32 %v288, %v290
    %v293 = vlaneseq
    %v294 = vshrl.u32 %v293, 7
    %v295 = vsub.s32 0, %v294
    %v296 = vrot.slane %v273, %v295
    %v298 = vmul.f32 %v296, %v291
    %v299 = vadd.f32 %v280, %v298
    %v300 = vsub.f32 %v299, 1.0
    %v301 = vmul.f32 %v300, 0.5
    %vm302 = vcmask 64512
    %303 = vst.msk [vmem:[#allocation4] sm:$0xff] %vm302, %v301
    %v304 = vpack.c.bf16 %v268, %v268
    %v305 = vld [vmem:[%s10] sm:$0xf]
    %v306 = vld [vmem:[%s11] sm:$0x1]
    %v308 = vlaneseq
    %v309 = vshrl.u32 %v308, 7
    %v310 = vsub.s32 0, %v309
    %v311 = vrot.slane %v306, %v310
    %v314 = vsel %vm302, %v304, 0
    %vm316 = vcmask 1043456
    %v318 = vsel %vm316, %v305, 0
    %320 = vmatprep.subr.bf16.mxu0 0
    %321 = vmatpush1.bf16.msra.mxu0 %v318
    %322 = vmatprep.subr.bf16.mxu0 0
    %323 = vmatpush1.bf16.msra.mxu0 0
    %324 = vmatprep.subr.bf16.mxu0 0
    %325 = vmatpush1.bf16.msra.mxu0 0
    %326 = vmatprep.subr.bf16.mxu0 0
    %327 = vmatpush1.bf16.msra.mxu0 0
    %328 = vmatprep.subr.bf16.mxu0 0
    %329 = vmatpush1.bf16.msra.mxu0 0
    %330 = vmatprep.subr.bf16.mxu0 0
    %331 = vmatpush1.bf16.msra.mxu0 0
    %332 = vmatprep.subr.bf16.mxu0 0
    %333 = vmatpush1.bf16.msra.mxu0 0
    %334 = vmatprep.subr.bf16.mxu0 0
    %335 = vmatpush1.bf16.msra.mxu0 0
    %336 = vmatprep.subr.bf16.mxu0 0
    %337 = vmatpush1.bf16.msra.mxu0 0
    %338 = vmatprep.subr.bf16.mxu0 0
    %339 = vmatpush1.bf16.msra.mxu0 0
    %340 = vmatprep.subr.bf16.mxu0 0
    %341 = vmatpush1.bf16.msra.mxu0 0
    %342 = vmatprep.subr.bf16.mxu0 0
    %343 = vmatpush1.bf16.msra.mxu0 0
    %344 = vmatprep.subr.bf16.mxu0 0
    %345 = vmatpush1.bf16.msra.mxu0 0
    %346 = vmatprep.subr.bf16.mxu0 0
    %347 = vmatpush1.bf16.msra.mxu0 0
    %348 = vmatprep.subr.bf16.mxu0 0
    %349 = vmatpush1.bf16.msra.mxu0 0
    %350 = vmatprep.subr.bf16.mxu0 0
    %351 = vmatpush1.bf16.msra.mxu0 0
    %352 = vmatprep.mubr.bf16.mxu0 0
    %353 = vmatmul.mubr.bf16.gmra.mrb[0].mxu0 %v314
    %v354 = vpop.f32.mrb[0].mxu0
    %v355 = vadd.f32 %v311, %v354
    %v356 = vpop.f32.mrb[0].mxu0
    %v357 = vpop.f32.mrb[0].mxu0
    %v358 = vpop.f32.mrb[0].mxu0
    %359 = vdwg.mxu0
    %v360 = vmax.f32 %v355, 0.0
    %v361 = vpack.c.bf16 %v360, %v360
    %v362 = vld [vmem:[%s12] sm:$0xff]
    %v363 = vld [vmem:[%s12 + $0x8] sm:$0xff]
    %v364 = vld [vmem:[%s13] sm:$0x3]
    %v366 = vlaneseq
    %v367 = vshrl.u32 %v366, 7
    %v368 = vsub.s32 0, %v367
    %v369 = vrot.slane %v364, %v368
    %v370 = vlaneseq
    %v371 = vshrl.u32 %v370, 7
    %v372 = vsub.s32 1, %v371
    %v373 = vrot.slane %v364, %v372
    %v378 = vunpack.c.l.b16 %v362
    %v379 = vunpack.c.h.b16 %v362
    %v380 = vunpack.c.l.b16 %v363
    %v381 = vunpack.c.h.b16 %v363
    %v382 = vpack.c.b16 %v380, %v378
    %v383 = vpack.c.b16 %v381, %v379
    %v387 = vsel %vm87, %v361, 0
    %389 = vmatprep.subr.bf16.mxu0 %v383
    %390 = vmatpush1.bf16.msra.mxu0 %v382
    %391 = vmatprep.subr.bf16.mxu0 0
    %392 = vmatpush1.bf16.msra.mxu0 0
    %393 = vmatprep.subr.bf16.mxu0 0
    %394 = vmatpush1.bf16.msra.mxu0 0
    %395 = vmatprep.subr.bf16.mxu0 0
    %396 = vmatpush1.bf16.msra.mxu0 0
    %397 = vmatprep.subr.bf16.mxu0 0
    %398 = vmatpush1.bf16.msra.mxu0 0
    %399 = vmatprep.subr.bf16.mxu0 0
    %400 = vmatpush1.bf16.msra.mxu0 0
    %401 = vmatprep.subr.bf16.mxu0 0
    %402 = vmatpush1.bf16.msra.mxu0 0
    %403 = vmatprep.subr.bf16.mxu0 0
    %404 = vmatpush1.bf16.msra.mxu0 0
    %405 = vmatprep.subr.bf16.mxu0 0
    %406 = vmatpush1.bf16.msra.mxu0 0
    %407 = vmatprep.subr.bf16.mxu0 0
    %408 = vmatpush1.bf16.msra.mxu0 0
    %409 = vmatprep.subr.bf16.mxu0 0
    %410 = vmatpush1.bf16.msra.mxu0 0
    %411 = vmatprep.subr.bf16.mxu0 0
    %412 = vmatpush1.bf16.msra.mxu0 0
    %413 = vmatprep.subr.bf16.mxu0 0
    %414 = vmatpush1.bf16.msra.mxu0 0
    %415 = vmatprep.subr.bf16.mxu0 0
    %416 = vmatpush1.bf16.msra.mxu0 0
    %417 = vmatprep.subr.bf16.mxu0 0
    %418 = vmatpush1.bf16.msra.mxu0 0
    %419 = vmatprep.subr.bf16.mxu0 0
    %420 = vmatpush1.bf16.msra.mxu0 0
    %421 = vmatprep.mubr.bf16.mxu0 0
    %422 = vmatmul.mubr.bf16.gmra.mrb[0].mxu0 %v387
    %v423 = vpop.f32.mrb[0].mxu0
    %v424 = vadd.f32 %v369, %v423
    %v425 = vpop.f32.mrb[0].mxu0
    %v426 = vadd.f32 %v373, %v425
    %v427 = vpop.f32.mrb[0].mxu0
    %v428 = vpop.f32.mrb[0].mxu0
    %429 = vdwg.mxu0
    %v430 = vld [vmem:[%s14] sm:$0xf]
    %v431 = vld [vmem:[%s15] sm:$0x1]
    %v433 = vlaneseq
    %v434 = vshrl.u32 %v433, 7
    %v435 = vsub.s32 0, %v434
    %v436 = vrot.slane %v431, %v435
    %v439 = vsel %vm316, %v430, 0
    %441 = vmatprep.subr.bf16.mxu0 0
    %442 = vmatpush1.bf16.msra.mxu0 %v439
    %443 = vmatprep.subr.bf16.mxu0 0
    %444 = vmatpush1.bf16.msra.mxu0 0
    %445 = vmatprep.subr.bf16.mxu0 0
    %446 = vmatpush1.bf16.msra.mxu0 0
    %447 = vmatprep.subr.bf16.mxu0 0
    %448 = vmatpush1.bf16.msra.mxu0 0
    %449 = vmatprep.subr.bf16.mxu0 0
    %450 = vmatpush1.bf16.msra.mxu0 0
    %451 = vmatprep.subr.bf16.mxu0 0
    %452 = vmatpush1.bf16.msra.mxu0 0
    %453 = vmatprep.subr.bf16.mxu0 0
    %454 = vmatpush1.bf16.msra.mxu0 0
    %455 = vmatprep.subr.bf16.mxu0 0
    %456 = vmatpush1.bf16.msra.mxu0 0
    %457 = vmatprep.subr.bf16.mxu0 0
    %458 = vmatpush1.bf16.msra.mxu0 0
    %459 = vmatprep.subr.bf16.mxu0 0
    %460 = vmatpush1.bf16.msra.mxu0 0
    %461 = vmatprep.subr.bf16.mxu0 0
    %462 = vmatpush1.bf16.msra.mxu0 0
    %463 = vmatprep.subr.bf16.mxu0 0
    %464 = vmatpush1.bf16.msra.mxu0 0
    %465 = vmatprep.subr.bf16.mxu0 0
    %466 = vmatpush1.bf16.msra.mxu0 0
    %467 = vmatprep.subr.bf16.mxu0 0
    %468 = vmatpush1.bf16.msra.mxu0 0
    %469 = vmatprep.subr.bf16.mxu0 0
    %470 = vmatpush1.bf16.msra.mxu0 0
    %471 = vmatprep.subr.bf16.mxu0 0
    %472 = vmatpush1.bf16.msra.mxu0 0
    %473 = vmatprep.mubr.bf16.mxu0 0
    %474 = vmatmul.mubr.bf16.gmra.mrb[0].mxu0 %v314
    %v475 = vpop.f32.mrb[0].mxu0
    %v476 = vadd.f32 %v436, %v475
    %v477 = vpop.f32.mrb[0].mxu0
    %v478 = vpop.f32.mrb[0].mxu0
    %v479 = vpop.f32.mrb[0].mxu0
    %480 = vdwg.mxu0
    %v481 = vmax.f32 %v476, 0.0
    %v482 = vpack.c.bf16 %v481, %v481
    %v483 = vld [vmem:[%s16] sm:$0xff]
    %v484 = vld [vmem:[%s16 + $0x8] sm:$0xff]
    %v485 = vld [vmem:[%s16 + $0x10] sm:$0xff]
    %v486 = vld [vmem:[%s16 + $0x18] sm:$0xff]
    %v487 = vld [vmem:[%s16 + $0x20] sm:$0xff]
    %v488 = vld [vmem:[%s16 + $0x28] sm:$0xff]
    %v489 = vld [vmem:[%s16 + $0x30] sm:$0xff]
    %v490 = vld [vmem:[%s16 + $0x38] sm:$0xff]
    %v491 = vld [vmem:[%s17] sm:$0xf]
    %v493 = vlaneseq
    %v494 = vshrl.u32 %v493, 7
    %v495 = vsub.s32 0, %v494
    %v496 = vrot.slane %v491, %v495
    %v497 = vlaneseq
    %v498 = vshrl.u32 %v497, 7
    %v499 = vsub.s32 1, %v498
    %v500 = vrot.slane %v491, %v499
    %v501 = vlaneseq
    %v502 = vshrl.u32 %v501, 7
    %v503 = vsub.s32 2, %v502
    %v504 = vrot.slane %v491, %v503
    %v505 = vlaneseq
    %v506 = vshrl.u32 %v505, 7
    %v507 = vsub.s32 3, %v506
    %v508 = vrot.slane %v491, %v507
    %v521 = vunpack.c.l.b16 %v483
    %v522 = vunpack.c.h.b16 %v483
    %v523 = vunpack.c.l.b16 %v484
    %v524 = vunpack.c.h.b16 %v484
    %v525 = vunpack.c.l.b16 %v485
    %v526 = vunpack.c.h.b16 %v485
    %v527 = vunpack.c.l.b16 %v486
    %v528 = vunpack.c.h.b16 %v486
    %v529 = vunpack.c.l.b16 %v487
    %v530 = vunpack.c.h.b16 %v487
    %v531 = vunpack.c.l.b16 %v488
    %v532 = vunpack.c.h.b16 %v488
    %v533 = vunpack.c.l.b16 %v489
    %v534 = vunpack.c.h.b16 %v489
    %v535 = vunpack.c.l.b16 %v490
    %v536 = vunpack.c.h.b16 %v490
    %v537 = vpack.c.b16 %v525, %v521
    %v538 = vpack.c.b16 %v526, %v522
    %v539 = vpack.c.b16 %v527, %v523
    %v540 = vpack.c.b16 %v528, %v524
    %v541 = vpack.c.b16 %v533, %v529
    %v542 = vpack.c.b16 %v534, %v530
    %v543 = vpack.c.b16 %v535, %v531
    %v544 = vpack.c.b16 %v536, %v532
    %v554 = vsel %vm156, %v482, 0
    %556 = vmatprep.subr.bf16.mxu0 %v538
    %557 = vmatpush1.bf16.msra.mxu0 %v537
    %558 = vmatprep.subr.bf16.mxu0 %v542
    %559 = vmatpush1.bf16.msra.mxu0 %v541
    %560 = vmatprep.subr.bf16.mxu0 0
    %561 = vmatpush1.bf16.msra.mxu0 0
    %562 = vmatprep.subr.bf16.mxu0 0
    %563 = vmatpush1.bf16.msra.mxu0 0
    %564 = vmatprep.subr.bf16.mxu0 0
    %565 = vmatpush1.bf16.msra.mxu0 0
    %566 = vmatprep.subr.bf16.mxu0 0
    %567 = vmatpush1.bf16.msra.mxu0 0
    %568 = vmatprep.subr.bf16.mxu0 0
    %569 = vmatpush1.bf16.msra.mxu0 0
    %570 = vmatprep.subr.bf16.mxu0 0
    %571 = vmatpush1.bf16.msra.mxu0 0
    %572 = vmatprep.subr.bf16.mxu0 0
    %573 = vmatpush1.bf16.msra.mxu0 0
    %574 = vmatprep.subr.bf16.mxu0 0
    %575 = vmatpush1.bf16.msra.mxu0 0
    %576 = vmatprep.subr.bf16.mxu0 0
    %577 = vmatpush1.bf16.msra.mxu0 0
    %578 = vmatprep.subr.bf16.mxu0 0
    %579 = vmatpush1.bf16.msra.mxu0 0
    %580 = vmatprep.subr.bf16.mxu0 0
    %581 = vmatpush1.bf16.msra.mxu0 0
    %582 = vmatprep.subr.bf16.mxu0 0
    %583 = vmatpush1.bf16.msra.mxu0 0
    %584 = vmatprep.subr.bf16.mxu0 0
    %585 = vmatpush1.bf16.msra.mxu0 0
    %586 = vmatprep.subr.bf16.mxu0 0
    %587 = vmatpush1.bf16.msra.mxu0 0
    %588 = vmatprep.mubr.bf16.mxu0 0
    %589 = vmatmul.mubr.bf16.gmra.mrb[0].mxu0 %v554
    %v590 = vpop.f32.mrb[0].mxu0
    %v591 = vadd.f32 %v496, %v590
    %v592 = vpop.f32.mrb[0].mxu0
    %v593 = vadd.f32 %v500, %v592
    %v594 = vpop.f32.mrb[0].mxu0
    %v595 = vpop.f32.mrb[0].mxu0
    %596 = vdwg.mxu0
    %597 = vmatprep.subr.bf16.mxu0 %v540
    %598 = vmatpush1.bf16.msra.mxu0 %v539
    %599 = vmatprep.subr.bf16.mxu0 %v544
    %600 = vmatpush1.bf16.msra.mxu0 %v543
    %601 = vmatprep.subr.bf16.mxu0 0
    %602 = vmatpush1.bf16.msra.mxu0 0
    %603 = vmatprep.subr.bf16.mxu0 0
    %604 = vmatpush1.bf16.msra.mxu0 0
    %605 = vmatprep.subr.bf16.mxu0 0
    %606 = vmatpush1.bf16.msra.mxu0 0
    %607 = vmatprep.subr.bf16.mxu0 0
    %608 = vmatpush1.bf16.msra.mxu0 0
    %609 = vmatprep.subr.bf16.mxu0 0
    %610 = vmatpush1.bf16.msra.mxu0 0
    %611 = vmatprep.subr.bf16.mxu0 0
    %612 = vmatpush1.bf16.msra.mxu0 0
    %613 = vmatprep.subr.bf16.mxu0 0
    %614 = vmatpush1.bf16.msra.mxu0 0
    %615 = vmatprep.subr.bf16.mxu0 0
    %616 = vmatpush1.bf16.msra.mxu0 0
    %617 = vmatprep.subr.bf16.mxu0 0
    %618 = vmatpush1.bf16.msra.mxu0 0
    %619 = vmatprep.subr.bf16.mxu0 0
    %620 = vmatpush1.bf16.msra.mxu0 0
    %621 = vmatprep.subr.bf16.mxu0 0
    %622 = vmatpush1.bf16.msra.mxu0 0
    %623 = vmatprep.subr.bf16.mxu0 0
    %624 = vmatpush1.bf16.msra.mxu0 0
    %625 = vmatprep.subr.bf16.mxu0 0
    %626 = vmatpush1.bf16.msra.mxu0 0
    %627 = vmatprep.subr.bf16.mxu0 0
    %628 = vmatpush1.bf16.msra.mxu0 0
    %629 = vmatprep.mubr.bf16.mxu0 0
    %630 = vmatmul.mubr.bf16.gmra.mrb[0].mxu0 %v554
    %v631 = vpop.f32.mrb[0].mxu0
    %v632 = vadd.f32 %v504, %v631
    %v633 = vpop.f32.mrb[0].mxu0
    %v634 = vadd.f32 %v508, %v633
    %v635 = vpop.f32.mrb[0].mxu0
    %v636 = vpop.f32.mrb[0].mxu0
    %637 = vdwg.mxu0
    %v638 = vmax.f32 %v591, 0.0
    %v639 = vmax.f32 %v593, 0.0
    %v640 = vmax.f32 %v632, 0.0
    %v641 = vmax.f32 %v634, 0.0
    %v642 = vpack.c.bf16 %v638, %v638
    %v643 = vpack.c.bf16 %v639, %v639
    %v644 = vpack.c.bf16 %v640, %v640
    %v645 = vpack.c.bf16 %v641, %v641
    %v646 = vld [vmem:[%s18] sm:$0xff]
    %v647 = vld [vmem:[%s18 + $0x8] sm:$0xff]
    %v648 = vld [vmem:[%s18 + $0x10] sm:$0xff]
    %v649 = vld [vmem:[%s18 + $0x18] sm:$0xff]
    %v650 = vld [vmem:[%s18 + $0x20] sm:$0xff]
    %v651 = vld [vmem:[%s18 + $0x28] sm:$0xff]
    %v652 = vld [vmem:[%s18 + $0x30] sm:$0xff]
    %v653 = vld [vmem:[%s18 + $0x38] sm:$0xff]
    %v654 = vld [vmem:[%s18 + $0x40] sm:$0xff]
    %v655 = vld [vmem:[%s18 + $0x48] sm:$0xff]
    %v656 = vld [vmem:[%s18 + $0x50] sm:$0xff]
    %v657 = vld [vmem:[%s18 + $0x58] sm:$0xff]
    %v658 = vld [vmem:[%s18 + $0x60] sm:$0xff]
    %v659 = vld [vmem:[%s18 + $0x68] sm:$0xff]
    %v660 = vld [vmem:[%s18 + $0x70] sm:$0xff]
    %v661 = vld [vmem:[%s18 + $0x78] sm:$0xff]
    %v662 = vld [vmem:[%s18 + $0x80] sm:$0xff]
    %v663 = vld [vmem:[%s18 + $0x88] sm:$0xff]
    %v664 = vld [vmem:[%s18 + $0x90] sm:$0xff]
    %v665 = vld [vmem:[%s18 + $0x98] sm:$0xff]
    %v666 = vld [vmem:[%s18 + $0xa0] sm:$0xff]
    %v667 = vld [vmem:[%s18 + $0xa8] sm:$0xff]
    %v668 = vld [vmem:[%s18 + $0xb0] sm:$0xff]
    %v669 = vld [vmem:[%s18 + $0xb8] sm:$0xff]
    %v670 = vld [vmem:[%s18 + $0xc0] sm:$0xff]
    %v671 = vld [vmem:[%s18 + $0xc8] sm:$0xff]
    %v672 = vld [vmem:[%s18 + $0xd0] sm:$0xff]
    %v673 = vld [vmem:[%s18 + $0xd8] sm:$0xff]
    %v674 = vld [vmem:[%s18 + $0xe0] sm:$0xff]
    %v675 = vld [vmem:[%s18 + $0xe8] sm:$0xff]
    %v676 = vld [vmem:[%s18 + $0xf0] sm:$0xff]
    %v677 = vld [vmem:[%s18 + $0xf8] sm:$0xff]
    %v678 = vld [vmem:[%s18 + $0x100] sm:$0xff]
    %v679 = vld [vmem:[%s18 + $0x108] sm:$0xff]
    %v680 = vld [vmem:[%s18 + $0x110] sm:$0xff]
    %v681 = vld [vmem:[%s18 + $0x118] sm:$0xff]
    %v682 = vld [vmem:[%s18 + $0x120] sm:$0xff]
    %v683 = vld [vmem:[%s18 + $0x128] sm:$0xff]
    %v684 = vld [vmem:[%s18 + $0x130] sm:$0xff]
    %v685 = vld [vmem:[%s18 + $0x138] sm:$0xff]
    %v686 = vld [vmem:[%s18 + $0x140] sm:$0xff]
    %v687 = vld [vmem:[%s18 + $0x148] sm:$0xff]
    %v688 = vld [vmem:[%s18 + $0x150] sm:$0xff]
    %v689 = vld [vmem:[%s18 + $0x158] sm:$0xff]
    %v690 = vld [vmem:[%s18 + $0x160] sm:$0xff]
    %v691 = vld [vmem:[%s18 + $0x168] sm:$0xff]
    %v692 = vld [vmem:[%s18 + $0x170] sm:$0xff]
    %v693 = vld [vmem:[%s18 + $0x178] sm:$0xff]
    %v694 = vld [vmem:[%s18 + $0x180] sm:$0xff]
    %v695 = vld [vmem:[%s18 + $0x188] sm:$0xff]
    %v696 = vld [vmem:[%s18 + $0x190] sm:$0xff]
    %v697 = vld [vmem:[%s18 + $0x198] sm:$0xff]
    %v698 = vld [vmem:[%s18 + $0x1a0] sm:$0xff]
    %v699 = vld [vmem:[%s18 + $0x1a8] sm:$0xff]
    %v700 = vld [vmem:[%s18 + $0x1b0] sm:$0xff]
    %v701 = vld [vmem:[%s18 + $0x1b8] sm:$0xff]
    %v702 = vld [vmem:[%s18 + $0x1c0] sm:$0xff]
    %v703 = vld [vmem:[%s18 + $0x1c8] sm:$0xff]
    %v704 = vld [vmem:[%s18 + $0x1d0] sm:$0xff]
    %v705 = vld [vmem:[%s18 + $0x1d8] sm:$0xff]
    %v706 = vld [vmem:[%s18 + $0x1e0] sm:$0xff]
    %v707 = vld [vmem:[%s18 + $0x1e8] sm:$0xff]
    %v708 = vld [vmem:[%s18 + $0x1f0] sm:$0xff]
    %v709 = vld [vmem:[%s18 + $0x1f8] sm:$0xff]
    %v710 = vld [vmem:[%s19] sm:$0x3]
    %v712 = vlaneseq
    %v713 = vshrl.u32 %v712, 7
    %v714 = vsub.s32 0, %v713
    %v715 = vrot.slane %v710, %v714
    %v716 = vlaneseq
    %v717 = vshrl.u32 %v716, 7
    %v718 = vsub.s32 1, %v717
    %v719 = vrot.slane %v710, %v718
    %v786 = vunpack.c.l.b16 %v646
    %v787 = vunpack.c.h.b16 %v646
    %v788 = vunpack.c.l.b16 %v647
    %v789 = vunpack.c.h.b16 %v647
    %v790 = vunpack.c.l.b16 %v648
    %v791 = vunpack.c.h.b16 %v648
    %v792 = vunpack.c.l.b16 %v649
    %v793 = vunpack.c.h.b16 %v649
    %v794 = vunpack.c.l.b16 %v650
    %v795 = vunpack.c.h.b16 %v650
    %v796 = vunpack.c.l.b16 %v651
    %v797 = vunpack.c.h.b16 %v651
    %v798 = vunpack.c.l.b16 %v652
    %v799 = vunpack.c.h.b16 %v652
    %v800 = vunpack.c.l.b16 %v653
    %v801 = vunpack.c.h.b16 %v653
    %v802 = vunpack.c.l.b16 %v654
    %v803 = vunpack.c.h.b16 %v654
    %v804 = vunpack.c.l.b16 %v655
    %v805 = vunpack.c.h.b16 %v655
    %v806 = vunpack.c.l.b16 %v656
    %v807 = vunpack.c.h.b16 %v656
    %v808 = vunpack.c.l.b16 %v657
    %v809 = vunpack.c.h.b16 %v657
    %v810 = vunpack.c.l.b16 %v658
    %v811 = vunpack.c.h.b16 %v658
    %v812 = vunpack.c.l.b16 %v659
    %v813 = vunpack.c.h.b16 %v659
    %v814 = vunpack.c.l.b16 %v660
    %v815 = vunpack.c.h.b16 %v660
    %v816 = vunpack.c.l.b16 %v661
    %v817 = vunpack.c.h.b16 %v661
    %v818 = vunpack.c.l.b16 %v662
    %v819 = vunpack.c.h.b16 %v662
    %v820 = vunpack.c.l.b16 %v663
    %v821 = vunpack.c.h.b16 %v663
    %v822 = vunpack.c.l.b16 %v664
    %v823 = vunpack.c.h.b16 %v664
    %v824 = vunpack.c.l.b16 %v665
    %v825 = vunpack.c.h.b16 %v665
    %v826 = vunpack.c.l.b16 %v666
    %v827 = vunpack.c.h.b16 %v666
    %v828 = vunpack.c.l.b16 %v667
    %v829 = vunpack.c.h.b16 %v667
    %v830 = vunpack.c.l.b16 %v668
    %v831 = vunpack.c.h.b16 %v668
    %v832 = vunpack.c.l.b16 %v669
    %v833 = vunpack.c.h.b16 %v669
    %v834 = vunpack.c.l.b16 %v670
    %v835 = vunpack.c.h.b16 %v670
    %v836 = vunpack.c.l.b16 %v671
    %v837 = vunpack.c.h.b16 %v671
    %v838 = vunpack.c.l.b16 %v672
    %v839 = vunpack.c.h.b16 %v672
    %v840 = vunpack.c.l.b16 %v673
    %v841 = vunpack.c.h.b16 %v673
    %v842 = vunpack.c.l.b16 %v674
    %v843 = vunpack.c.h.b16 %v674
    %v844 = vunpack.c.l.b16 %v675
    %v845 = vunpack.c.h.b16 %v675
    %v846 = vunpack.c.l.b16 %v676
    %v847 = vunpack.c.h.b16 %v676
    %v848 = vunpack.c.l.b16 %v677
    %v849 = vunpack.c.h.b16 %v677
    %v850 = vunpack.c.l.b16 %v678
    %v851 = vunpack.c.h.b16 %v678
    %v852 = vunpack.c.l.b16 %v679
    %v853 = vunpack.c.h.b16 %v679
    %v854 = vunpack.c.l.b16 %v680
    %v855 = vunpack.c.h.b16 %v680
    %v856 = vunpack.c.l.b16 %v681
    %v857 = vunpack.c.h.b16 %v681
    %v858 = vunpack.c.l.b16 %v682
    %v859 = vunpack.c.h.b16 %v682
    %v860 = vunpack.c.l.b16 %v683
    %v861 = vunpack.c.h.b16 %v683
    %v862 = vunpack.c.l.b16 %v684
    %v863 = vunpack.c.h.b16 %v684
    %v864 = vunpack.c.l.b16 %v685
    %v865 = vunpack.c.h.b16 %v685
    %v866 = vunpack.c.l.b16 %v686
    %v867 = vunpack.c.h.b16 %v686
    %v868 = vunpack.c.l.b16 %v687
    %v869 = vunpack.c.h.b16 %v687
    %v870 = vunpack.c.l.b16 %v688
    %v871 = vunpack.c.h.b16 %v688
    %v872 = vunpack.c.l.b16 %v689
    %v873 = vunpack.c.h.b16 %v689
    %v874 = vunpack.c.l.b16 %v690
    %v875 = vunpack.c.h.b16 %v690
    %v876 = vunpack.c.l.b16 %v691
    %v877 = vunpack.c.h.b16 %v691
    %v878 = vunpack.c.l.b16 %v692
    %v879 = vunpack.c.h.b16 %v692
    %v880 = vunpack.c.l.b16 %v693
    %v881 = vunpack.c.h.b16 %v693
    %v882 = vunpack.c.l.b16 %v694
    %v883 = vunpack.c.h.b16 %v694
    %v884 = vunpack.c.l.b16 %v695
    %v885 = vunpack.c.h.b16 %v695
    %v886 = vunpack.c.l.b16 %v696
    %v887 = vunpack.c.h.b16 %v696
    %v888 = vunpack.c.l.b16 %v697
    %v889 = vunpack.c.h.b16 %v697
    %v890 = vunpack.c.l.b16 %v698
    %v891 = vunpack.c.h.b16 %v698
    %v892 = vunpack.c.l.b16 %v699
    %v893 = vunpack.c.h.b16 %v699
    %v894 = vunpack.c.l.b16 %v700
    %v895 = vunpack.c.h.b16 %v700
    %v896 = vunpack.c.l.b16 %v701
    %v897 = vunpack.c.h.b16 %v701
    %v898 = vunpack.c.l.b16 %v702
    %v899 = vunpack.c.h.b16 %v702
    %v900 = vunpack.c.l.b16 %v703
    %v901 = vunpack.c.h.b16 %v703
    %v902 = vunpack.c.l.b16 %v704
    %v903 = vunpack.c.h.b16 %v704
    %v904 = vunpack.c.l.b16 %v705
    %v905 = vunpack.c.h.b16 %v705
    %v906 = vunpack.c.l.b16 %v706
    %v907 = vunpack.c.h.b16 %v706
    %v908 = vunpack.c.l.b16 %v707
    %v909 = vunpack.c.h.b16 %v707
    %v910 = vunpack.c.l.b16 %v708
    %v911 = vunpack.c.h.b16 %v708
    %v912 = vunpack.c.l.b16 %v709
    %v913 = vunpack.c.h.b16 %v709
    %v914 = vpack.c.b16 %v788, %v786
    %v915 = vpack.c.b16 %v789, %v787
    %v916 = vpack.c.b16 %v792, %v790
    %v917 = vpack.c.b16 %v793, %v791
    %v918 = vpack.c.b16 %v796, %v794
    %v919 = vpack.c.b16 %v797, %v795
    %v920 = vpack.c.b16 %v800, %v798
    %v921 = vpack.c.b16 %v801, %v799
    %v922 = vpack.c.b16 %v804, %v802
    %v923 = vpack.c.b16 %v805, %v803
    %v924 = vpack.c.b16 %v808, %v806
    %v925 = vpack.c.b16 %v809, %v807
    %v926 = vpack.c.b16 %v812, %v810
    %v927 = vpack.c.b16 %v813, %v811
    %v928 = vpack.c.b16 %v816, %v814
    %v929 = vpack.c.b16 %v817, %v815
    %v930 = vpack.c.b16 %v820, %v818
    %v931 = vpack.c.b16 %v821, %v819
    %v932 = vpack.c.b16 %v824, %v822
    %v933 = vpack.c.b16 %v825, %v823
    %v934 = vpack.c.b16 %v828, %v826
    %v935 = vpack.c.b16 %v829, %v827
    %v936 = vpack.c.b16 %v832, %v830
    %v937 = vpack.c.b16 %v833, %v831
    %v938 = vpack.c.b16 %v836, %v834
    %v939 = vpack.c.b16 %v837, %v835
    %v940 = vpack.c.b16 %v840, %v838
    %v941 = vpack.c.b16 %v841, %v839
    %v942 = vpack.c.b16 %v844, %v842
    %v943 = vpack.c.b16 %v845, %v843
    %v944 = vpack.c.b16 %v848, %v846
    %v945 = vpack.c.b16 %v849, %v847
    %v946 = vpack.c.b16 %v852, %v850
    %v947 = vpack.c.b16 %v853, %v851
    %v948 = vpack.c.b16 %v856, %v854
    %v949 = vpack.c.b16 %v857, %v855
    %v950 = vpack.c.b16 %v860, %v858
    %v951 = vpack.c.b16 %v861, %v859
    %v952 = vpack.c.b16 %v864, %v862
    %v953 = vpack.c.b16 %v865, %v863
    %v954 = vpack.c.b16 %v868, %v866
    %v955 = vpack.c.b16 %v869, %v867
    %v956 = vpack.c.b16 %v872, %v870
    %v957 = vpack.c.b16 %v873, %v871
    %v958 = vpack.c.b16 %v876, %v874
    %v959 = vpack.c.b16 %v877, %v875
    %v960 = vpack.c.b16 %v880, %v878
    %v961 = vpack.c.b16 %v881, %v879
    %v962 = vpack.c.b16 %v884, %v882
    %v963 = vpack.c.b16 %v885, %v883
    %v964 = vpack.c.b16 %v888, %v886
    %v965 = vpack.c.b16 %v889, %v887
    %v966 = vpack.c.b16 %v892, %v890
    %v967 = vpack.c.b16 %v893, %v891
    %v968 = vpack.c.b16 %v896, %v894
    %v969 = vpack.c.b16 %v897, %v895
    %v970 = vpack.c.b16 %v900, %v898
    %v971 = vpack.c.b16 %v901, %v899
    %v972 = vpack.c.b16 %v904, %v902
    %v973 = vpack.c.b16 %v905, %v903
    %v974 = vpack.c.b16 %v908, %v906
    %v975 = vpack.c.b16 %v909, %v907
    %v976 = vpack.c.b16 %v912, %v910
    %v977 = vpack.c.b16 %v913, %v911
    %1042 = vmatprep.subr.bf16.mxu0 %v915
    %1043 = vmatpush1.bf16.msra.mxu0 %v914
    %1044 = vmatprep.subr.bf16.mxu0 %v917
    %1045 = vmatpush1.bf16.msra.mxu0 %v916
    %1046 = vmatprep.subr.bf16.mxu0 %v919
    %1047 = vmatpush1.bf16.msra.mxu0 %v918
    %1048 = vmatprep.subr.bf16.mxu0 %v921
    %1049 = vmatpush1.bf16.msra.mxu0 %v920
    %1050 = vmatprep.subr.bf16.mxu0 %v923
    %1051 = vmatpush1.bf16.msra.mxu0 %v922
    %1052 = vmatprep.subr.bf16.mxu0 %v925
    %1053 = vmatpush1.bf16.msra.mxu0 %v924
    %1054 = vmatprep.subr.bf16.mxu0 %v927
    %1055 = vmatpush1.bf16.msra.mxu0 %v926
    %1056 = vmatprep.subr.bf16.mxu0 %v929
    %1057 = vmatpush1.bf16.msra.mxu0 %v928
    %1058 = vmatprep.subr.bf16.mxu0 %v931
    %1059 = vmatpush1.bf16.msra.mxu0 %v930
    %1060 = vmatprep.subr.bf16.mxu0 %v933
    %1061 = vmatpush1.bf16.msra.mxu0 %v932
    %1062 = vmatprep.subr.bf16.mxu0 %v935
    %1063 = vmatpush1.bf16.msra.mxu0 %v934
    %1064 = vmatprep.subr.bf16.mxu0 %v937
    %1065 = vmatpush1.bf16.msra.mxu0 %v936
    %1066 = vmatprep.subr.bf16.mxu0 %v939
    %1067 = vmatpush1.bf16.msra.mxu0 %v938
    %1068 = vmatprep.subr.bf16.mxu0 %v941
    %1069 = vmatpush1.bf16.msra.mxu0 %v940
    %1070 = vmatprep.subr.bf16.mxu0 %v943
    %1071 = vmatpush1.bf16.msra.mxu0 %v942
    %1072 = vmatprep.subr.bf16.mxu0 %v945
    %1073 = vmatpush1.bf16.msra.mxu0 %v944
    %1074 = vmatprep.mubr.bf16.mxu0 %v643
    %1075 = vmatmul.mubr.bf16.gmra.mrb[0].mxu0 %v642
    %v1076 = vpop.f32.mrb[0].mxu0
    %v1077 = vadd.f32 %v715, %v1076
    %v1078 = vpop.f32.mrb[0].mxu0
    %v1079 = vadd.f32 %v719, %v1078
    %v1080 = vpop.f32.mrb[0].mxu0
    %v1081 = vpop.f32.mrb[0].mxu0
    %1082 = vdwg.mxu0
    %1083 = vmatprep.subr.bf16.mxu0 %v947
    %1084 = vmatpush1.bf16.msra.mxu0 %v946
    %1085 = vmatprep.subr.bf16.mxu0 %v949
    %1086 = vmatpush1.bf16.msra.mxu0 %v948
    %1087 = vmatprep.subr.bf16.mxu0 %v951
    %1088 = vmatpush1.bf16.msra.mxu0 %v950
    %1089 = vmatprep.subr.bf16.mxu0 %v953
    %1090 = vmatpush1.bf16.msra.mxu0 %v952
    %1091 = vmatprep.subr.bf16.mxu0 %v955
    %1092 = vmatpush1.bf16.msra.mxu0 %v954
    %1093 = vmatprep.subr.bf16.mxu0 %v957
    %1094 = vmatpush1.bf16.msra.mxu0 %v956
    %1095 = vmatprep.subr.bf16.mxu0 %v959
    %1096 = vmatpush1.bf16.msra.mxu0 %v958
    %1097 = vmatprep.subr.bf16.mxu0 %v961
    %1098 = vmatpush1.bf16.msra.mxu0 %v960
    %1099 = vmatprep.subr.bf16.mxu0 %v963
    %1100 = vmatpush1.bf16.msra.mxu0 %v962
    %1101 = vmatprep.subr.bf16.mxu0 %v965
    %1102 = vmatpush1.bf16.msra.mxu0 %v964
    %1103 = vmatprep.subr.bf16.mxu0 %v967
    %1104 = vmatpush1.bf16.msra.mxu0 %v966
    %1105 = vmatprep.subr.bf16.mxu0 %v969
    %1106 = vmatpush1.bf16.msra.mxu0 %v968
    %1107 = vmatprep.subr.bf16.mxu0 %v971
    %1108 = vmatpush1.bf16.msra.mxu0 %v970
    %1109 = vmatprep.subr.bf16.mxu0 %v973
    %1110 = vmatpush1.bf16.msra.mxu0 %v972
    %1111 = vmatprep.subr.bf16.mxu0 %v975
    %1112 = vmatpush1.bf16.msra.mxu0 %v974
    %1113 = vmatprep.subr.bf16.mxu0 %v977
    %1114 = vmatpush1.bf16.msra.mxu0 %v976
    %1115 = vmatprep.mubr.bf16.mxu0 %v645
    %1116 = vmatmul.mubr.bf16.gmra.mrb[0].mxu0 %v644
    %v1117 = vpop.f32.mrb[0].mxu0
    %v1118 = vadd.f32 %v1077, %v1117
    %v1119 = vpop.f32.mrb[0].mxu0
    %v1120 = vadd.f32 %v1079, %v1119
    %v1121 = vpop.f32.mrb[0].mxu0
    %v1122 = vpop.f32.mrb[0].mxu0
    %1123 = vdwg.mxu0
    %v1124 = vadd.f32 %v424, %v1118
    %v1125 = vadd.f32 %v426, %v1120
    %1126 = vst [vmem:[#allocation2] sm:$0xff] %v1124
    %vm1127 = vcmask 523264
    %1128 = vst.msk [vmem:[#allocation2 + $0x8] sm:$0xff] %vm1127, %v1125
    // Predicated region
    $region82: #{tpu_custom_call.1} parent=1 // pred_check
      _
    $region83: #{tpu_custom_call.1} parent=1 // pred_check_branch
      %1130 = sbr.rel (0) target = $region85
    $region84: #{tpu_custom_call.1} parent=1 // pred_region
      %s1132 = ssub.s32 256, 256
      %1133 = vsyncadd [#allocation3], %s1132
      %s1135 = sshll.u32 [#allocation2], 4
      %s1136 = int_to_ptr.vmem [resolvable:$true] %s1135
      %1138 = dma.vmem_to_hbm [thread:$0]  %s1136, 256, %s20, [#allocation3]
    $region85: #{tpu_custom_call.1} parent=1 // pred_fallthru
      _
    // Predicated region
    $region86: #{tpu_custom_call.1} parent=1 // pred_check
      _
    $region87: #{tpu_custom_call.1} parent=1 // pred_check_branch
      %1140 = sbr.rel (0) target = $region89
    $region88: #{tpu_custom_call.1} parent=1 // pred_region
      %s1142 = ssub.s32 128, 128
      %1143 = vsyncadd [#allocation5], %s1142
      %s1145 = sshll.u32 [#allocation4], 4
      %s1146 = int_to_ptr.vmem [resolvable:$true] %s1145
      %1148 = dma.vmem_to_hbm [thread:$0]  %s1146, 128, %s21, [#allocation5]
    $region89: #{tpu_custom_call.1} parent=1 // pred_fallthru
      _
    // Predicated region
    $region90: #{tpu_custom_call.1} parent=1 // pred_check
      _
    $region91: #{tpu_custom_call.1} parent=1 // pred_check_branch
      %1150 = sbr.rel (0) target = $region93
    $region92: #{tpu_custom_call.1} parent=1 // pred_region
      %1151 = dma.done [#allocation3], 256
    $region93: #{tpu_custom_call.1} parent=1 // pred_fallthru
      _
    // Predicated region
    $region94: #{tpu_custom_call.1} parent=1 // pred_check
      _
    $region95: #{tpu_custom_call.1} parent=1 // pred_check_branch
      %1153 = sbr.rel (0) target = $region97
    $region96: #{tpu_custom_call.1} parent=1 // pred_region
      %1154 = dma.done [#allocation5], 128
    $region97: #{tpu_custom_call.1} parent=1 // pred_fallthru
      _
    %1155 = vsyncpa [#allocation3], 1
    %1156 = vsyncpa [#allocation5], 1

</llo_original>
